<compile_context>
chip_gen: v6e
topology: v6e:2x2x1
jax: 0.10.0
libtpu: 0.0.40
codegen_flags: <defaults>
</compile_context>

<pallas_src>
import inspect
import math

import numpy as np
import jax
import jax.numpy as jnp
from jax import lax
from jax.experimental import pallas as pl
from jax.experimental.pallas import tpu as pltpu


# Single-buffer the grid-invariant operands if this JAX version exposes the API.
_CONST_SPEC_KW = {}
if hasattr(pl, "Buffered"):
    try:
        if "pipeline_mode" in inspect.signature(pl.BlockSpec).parameters:
            _CONST_SPEC_KW = dict(pipeline_mode=pl.Buffered(1))
    except (TypeError, ValueError):
        _CONST_SPEC_KW = {}


def _pad8(n):
    return -(-n // 8) * 8


def _phase_tap_map():
    """Distinct (half-res shift, source phase) -> list of (output phase, tap offset) users."""
    m = {}
    for phase in (0, 1):
        for off in (-1, 0, 1):
            s, p = divmod(phase + off, 2)   # full-res offset -> half-res shift / source phase
            m.setdefault((s, p), []).append((phase, off))
    return sorted(m.items())                # 4 distinct combos, 6 users total


def semi_shift_depthwise(en, de, wen, ben, wde, wdw, bdw):
    """en: (B,Cen,H,W), de: (B,Cde,H/2,W/2), NCHW.  Returns (B,Cout,H,W) float32."""
    B, Cen, H, W = en.shape
    _, Cde, Hd, Wd = de.shape
    C = wen.shape[1]
    assert H == 2 * Hd and W == 2 * Wd
    N = Hd * Wd   # half-res plane size; a multiple of 128 keeps all stores lane-dense

    # ---- batches per grid step: fold as much of the batch into the lane axis as a
    #      conservative (v7x-safe) per-step VMEM budget allows (review item: amortize
    #      the ~0.35us/step overhead; split only when a block would blow the budget).
    budget = 24 << 20
    g = 1
    for cand in range(1, B + 1):
        if B % cand:
            continue
        L_c = cand * N
        act = 4 * L_c * (4 * _pad8(Cen) + _pad8(Cde) + 4 * _pad8(C))   # in + out bytes
        tmp = 4 * L_c * _pad8(C) * 48                                  # hoisted temporaries
        if 2 * act + tmp <= budget:
            g = cand
    G = B // g
    L = g * N        # lane length of one grid step (planes concatenated along lanes)

    row_map = _phase_tap_map()   # distinct (sy, row-phase) -> [(i, oy), ...]
    col_map = _phase_tap_map()   # distinct (sx, col-phase) -> [(j, ox), ...]

    # ---- host-side boundary masks: one f32 0/1 row per non-trivial (sy, sx) shift ----
    rr = jnp.repeat(jnp.arange(Hd), Wd)
    cc = jnp.tile(jnp.arange(Wd), Hd)
    ones = jnp.ones((N,), bool)
    my = {-1: rr >= 1, 0: ones, 1: rr < Hd - 1}
    mx = {-1: cc >= 1, 0: ones, 1: cc < Wd - 1}
    mask_rows, mask_id = [], {}
    for sy in (-1, 0, 1):
        for sx in (-1, 0, 1):
            if sy == 0 and sx == 0:
                continue
            mask_id[(sy, sx)] = len(mask_rows)
            mask_rows.append((my[sy] & mx[sx]).astype(jnp.float32))
    n_masks = len(mask_rows)                                              # 8
    mask8 = jnp.tile(jnp.stack(mask_rows, 0), (1, g)).reshape(n_masks, 1, L)

    # ------------------------- kernel (one batch group / step) -------------------------
    def kernel(en_ref, de_ref, wen_ref, wde_ref, cst_ref, msk_ref, out_ref):
        cst = cst_ref[...]                                     # (C, 11): [ben, bdw, 9 taps]
        ben_b = jnp.broadcast_to(cst[:, 0:1], (C, 4 * L))
        bdw_b = jnp.broadcast_to(cst[:, 1:2], (C, L))
        tap_b = [jnp.broadcast_to(cst[:, 2 + t:3 + t], (C, L)) for t in range(9)]
        msk_b = [jnp.broadcast_to(msk_ref[k], (C, L)) for k in range(n_masks)]

        def shift(x, sy, sx):
            # out[:, r*Wd+c] = x[:, (r+sy)*Wd + (c+sx)] within its own half-res plane,
            # zero outside.  pltpu.roll runs on the XLU; lanes that wrap across a
            # plane/batch boundary are always covered by the precomputed mask.
            if sy == 0 and sx == 0:
                return x
            v = pltpu.roll(x, (-(sy * Wd + sx)) % L, axis=1)
            return v * msk_b[mask_id[(sy, sx)]]

        # ---- 1x1 compressors: one MXU matmul per branch ----
        enc_all = jnp.dot(wen_ref[...], en_ref[...],
                          preferred_element_type=jnp.float32) + ben_b    # (C, 4L)
        dec = jnp.dot(wde_ref[...], de_ref[...],
                      preferred_element_type=jnp.float32)                # (C, L)
        enc = [enc_all[:, k * L:(k + 1) * L] for k in range(4)]          # 128-aligned slices

        # ---- de branch: depthwise 3x3 at half resolution; nearest-2x upsample means
        #      the same tensor seeds the accumulator of all four output phases ----
        conv_de = bdw_b
        for oy in (-1, 0, 1):
            for ox in (-1, 0, 1):
                conv_de = conv_de + shift(dec, oy, ox) * tap_b[(oy + 1) * 3 + (ox + 1)]
        base = conv_de + bdw_b            # + depthwise bias of the en branch as well

        # ---- en branch: 16 distinct shifted tensors (12 rolls), reused by 36 tap FMAs ----
        acc = [base, base, base, base]
        for (sy, a), rusers in row_map:
            for (sx, pb), cusers in col_map:
                sh = shift(enc[2 * a + pb], sy, sx)
                for (i, oy) in rusers:
                    for (j, ox) in cusers:
                        acc[2 * i + j] = acc[2 * i + j] + sh * tap_b[(oy + 1) * 3 + (ox + 1)]

        for k in range(4):
            out_ref[k] = acc[k]

    # ------------------- XLA-side glue (layout only, no compute) -----------------
    # TODO(synk): at production scale keep producers/consumers in this polyphase layout
    # (or fold the (de)interleave into the adjacent op); each transpose below is a full
    # HBM read+write of the tensor and rivals the kernel's own HBM traffic on v5e.
    en_r = en.reshape(G, g, Cen, Hd, 2, Wd, 2)
    en_ph = jnp.transpose(en_r, (0, 2, 4, 6, 1, 3, 5)).reshape(G, Cen, 4 * L)
    de_r = de.reshape(G, g, Cde, Hd, Wd)
    de_f = jnp.transpose(de_r, (0, 2, 1, 3, 4)).reshape(G, Cde, L)

    wenT = jnp.transpose(wen)                         # (C, Cen)
    wdeT = jnp.transpose(wde)                         # (C, Cde)
    cst = jnp.concatenate(
        [ben.reshape(C, 1), bdw.reshape(C, 1), wdw.reshape(9, C).T], axis=1)   # (C, 11)

    # Explicit VMEM request: ~2x the true double-buffered per-step footprint plus
    # headroom, clamped so it never oversubscribes a 64 MiB v7x TensorCore.
    act = 4 * L * (4 * _pad8(Cen) + _pad8(Cde) + 4 * _pad8(C))
    cns = 4 * (_pad8(C) * 128 * 3 + _pad8(n_masks) * max(L, 128))
    tmp = 4 * L * _pad8(C) * 48
    step_bytes = 2 * act + cns + tmp
    vmem_limit = int(min(max(2 * step_bytes + (4 << 20), 8 << 20), 40 << 20))

    out_ph = pl.pallas_call(
        kernel,
        out_shape=jax.ShapeDtypeStruct((G, 4, C, L), jnp.float32),
        grid=(G,),
        in_specs=[
            pl.BlockSpec((None, Cen, 4 * L), lambda b: (b, 0, 0)),          # en (polyphase)
            pl.BlockSpec((None, Cde, L), lambda b: (b, 0, 0)),              # de (half res)
            pl.BlockSpec((C, Cen), lambda b: (0, 0), **_CONST_SPEC_KW),     # wen^T
            pl.BlockSpec((C, Cde), lambda b: (0, 0), **_CONST_SPEC_KW),     # wde^T
            pl.BlockSpec((C, 11), lambda b: (0, 0), **_CONST_SPEC_KW),      # biases + taps
            pl.BlockSpec((n_masks, 1, L), lambda b: (0, 0, 0), **_CONST_SPEC_KW),  # masks
        ],
        out_specs=pl.BlockSpec((None, 4, C, L), lambda b: (b, 0, 0, 0)),
        compiler_params=pltpu.CompilerParams(
            dimension_semantics=("parallel",),
            vmem_limit_bytes=vmem_limit),
    )(en_ph, de_f, wenT, wdeT, cst, mask8)

    # polyphase -> NCHW: out[b, c, 2*hd+i, 2*wd+j] = out_ph[gb, 2*i+j, c, bg*N + hd*Wd + wd]
    out = out_ph.reshape(G, 2, 2, C, g, Hd, Wd)
    out = jnp.transpose(out, (0, 4, 3, 5, 1, 6, 2)).reshape(B, C, H, W)
    return out


def reference(en, de, wen, ben, wde, wdw, bdw):
    """Plain-JAX reference mirroring the PyTorch module (NCHW)."""
    C = wen.shape[1]
    dn = ("NCHW", "OIHW", "NCHW")
    wen_oihw = wen.T.reshape(C, wen.shape[0], 1, 1)
    wde_oihw = wde.T.reshape(C, wde.shape[0], 1, 1)
    wdw_oihw = jnp.transpose(wdw, (2, 0, 1)).reshape(C, 1, 3, 3)

    enc = lax.conv_general_dilated(en, wen_oihw, (1, 1), "VALID",
                                   dimension_numbers=dn) + ben.reshape(1, C, 1, 1)
    dec = lax.conv_general_dilated(de, wde_oihw, (1, 1), "VALID",
                                   dimension_numbers=dn)

    def dw(x):
        return lax.conv_general_dilated(x, wdw_oihw, (1, 1), "SAME",
                                        feature_group_count=C,
                                        dimension_numbers=dn) + bdw.reshape(1, C, 1, 1)

    a = dw(enc)
    b = dw(dec)
    b_up = jnp.repeat(jnp.repeat(b, 2, axis=2), 2, axis=3)
    return a + b_up


def _xavier_uniform(key, shape, fan_in, fan_out):
    bound = math.sqrt(6.0 / (fan_in + fan_out))
    return jax.random.uniform(key, shape, jnp.float32, -bound, bound)


if __name__ == "__main__":
    # Small shapes consistent with the module: de at half the spatial size of en.
    # Hd*Wd = 256 keeps the flattened half-res spatial (lane) dim a multiple of 128.
    B, Cen, Cde, C = 2, 6, 5, 8
    H = W = 32
    Hd = Wd = 16

    key = jax.random.PRNGKey(0)
    k_en, k_de, k1, k2, k3, k4, k5 = jax.random.split(key, 7)

    en = jax.random.normal(k_en, (B, Cen, H, W), jnp.float32)
    de = jax.random.normal(k_de, (B, Cde, Hd, Wd), jnp.float32)

    wen = _xavier_uniform(k1, (Cen, C), Cen, C)                   # compressor_en (1x1)
    ben = jax.random.uniform(k2, (C,), jnp.float32, -0.1, 0.1)    # compressor_en bias
    wde = _xavier_uniform(k3, (Cde, C), Cde, C)                   # compressor_de (1x1, no bias)
    wdw = _xavier_uniform(k4, (3, 3, C), 9, 9 * C)                # depthwise 3x3
    bdw = jax.random.uniform(k5, (C,), jnp.float32, -0.1, 0.1)    # depthwise bias

    out = jax.jit(semi_shift_depthwise)(en, de, wen, ben, wde, wdw, bdw)
    out = jax.block_until_ready(out)

    ref = reference(en, de, wen, ben, wde, wdw, bdw)
    np.testing.assert_allclose(np.asarray(out), np.asarray(ref), rtol=1e-4, atol=1e-4)

    print("KERNEL_OK")
</pallas_src>

<mosaic_0001>
module attributes {stable_mosaic.version = 11 : i64} {
  func.func @kernel(%arg0: i32, %arg1: memref<1x6x2048xf32, #tpu.memory_space<vmem>>, %arg2: memref<1x5x512xf32, #tpu.memory_space<vmem>>, %arg3: memref<8x6xf32, #tpu.memory_space<vmem>>, %arg4: memref<8x5xf32, #tpu.memory_space<vmem>>, %arg5: memref<8x11xf32, #tpu.memory_space<vmem>>, %arg6: memref<8x1x512xf32, #tpu.memory_space<vmem>>, %arg7: memref<1x4x8x512xf32, #tpu.memory_space<vmem>>) attributes {dimension_semantics = [#tpu.dimension_semantics<parallel>], iteration_bounds = array<i64: 1>, scalar_prefetch = 0 : i64, scratch_operands = 0 : i64, tpu.core_type = #tpu.core_type<tc>, window_params = [{transform_indices = @transform_0, window_bounds = array<i64: 1, 6, 2048>}, {transform_indices = @transform_1, window_bounds = array<i64: 1, 5, 512>}, {pipeline_mode = #tpu.pipeline_mode<synchronous>, transform_indices = @transform_2, window_bounds = array<i64: 8, 6>}, {pipeline_mode = #tpu.pipeline_mode<synchronous>, transform_indices = @transform_3, window_bounds = array<i64: 8, 5>}, {pipeline_mode = #tpu.pipeline_mode<synchronous>, transform_indices = @transform_4, window_bounds = array<i64: 8, 11>}, {pipeline_mode = #tpu.pipeline_mode<synchronous>, transform_indices = @transform_5, window_bounds = array<i64: 8, 1, 512>}, {transform_indices = @transform_6, window_bounds = array<i64: 1, 4, 8, 512>}]} {
    %c0 = arith.constant 0 : index
    %c0_0 = arith.constant 0 : index
    %0 = vector.load %arg5[%c0, %c0_0] : memref<8x11xf32, #tpu.memory_space<vmem>>, vector<8x11xf32>
    %1 = vector.extract_strided_slice %0 {offsets = [0, 0], sizes = [8, 1], strides = [1, 1]} : vector<8x11xf32> to vector<8x1xf32>
    %2 = vector.shape_cast %1 : vector<8x1xf32> to vector<8x1xf32>
    %3 = vector.broadcast %2 : vector<8x1xf32> to vector<8x2048xf32>
    %4 = vector.extract_strided_slice %0 {offsets = [0, 1], sizes = [8, 1], strides = [1, 1]} : vector<8x11xf32> to vector<8x1xf32>
    %5 = vector.shape_cast %4 : vector<8x1xf32> to vector<8x1xf32>
    %6 = vector.broadcast %5 : vector<8x1xf32> to vector<8x512xf32>
    %7 = vector.extract_strided_slice %0 {offsets = [0, 2], sizes = [8, 1], strides = [1, 1]} : vector<8x11xf32> to vector<8x1xf32>
    %8 = vector.shape_cast %7 : vector<8x1xf32> to vector<8x1xf32>
    %9 = vector.broadcast %8 : vector<8x1xf32> to vector<8x512xf32>
    %10 = vector.extract_strided_slice %0 {offsets = [0, 3], sizes = [8, 1], strides = [1, 1]} : vector<8x11xf32> to vector<8x1xf32>
    %11 = vector.shape_cast %10 : vector<8x1xf32> to vector<8x1xf32>
    %12 = vector.broadcast %11 : vector<8x1xf32> to vector<8x512xf32>
    %13 = vector.extract_strided_slice %0 {offsets = [0, 4], sizes = [8, 1], strides = [1, 1]} : vector<8x11xf32> to vector<8x1xf32>
    %14 = vector.shape_cast %13 : vector<8x1xf32> to vector<8x1xf32>
    %15 = vector.broadcast %14 : vector<8x1xf32> to vector<8x512xf32>
    %16 = vector.extract_strided_slice %0 {offsets = [0, 5], sizes = [8, 1], strides = [1, 1]} : vector<8x11xf32> to vector<8x1xf32>
    %17 = vector.shape_cast %16 : vector<8x1xf32> to vector<8x1xf32>
    %18 = vector.broadcast %17 : vector<8x1xf32> to vector<8x512xf32>
    %19 = vector.extract_strided_slice %0 {offsets = [0, 6], sizes = [8, 1], strides = [1, 1]} : vector<8x11xf32> to vector<8x1xf32>
    %20 = vector.shape_cast %19 : vector<8x1xf32> to vector<8x1xf32>
    %21 = vector.broadcast %20 : vector<8x1xf32> to vector<8x512xf32>
    %22 = vector.extract_strided_slice %0 {offsets = [0, 7], sizes = [8, 1], strides = [1, 1]} : vector<8x11xf32> to vector<8x1xf32>
    %23 = vector.shape_cast %22 : vector<8x1xf32> to vector<8x1xf32>
    %24 = vector.broadcast %23 : vector<8x1xf32> to vector<8x512xf32>
    %25 = vector.extract_strided_slice %0 {offsets = [0, 8], sizes = [8, 1], strides = [1, 1]} : vector<8x11xf32> to vector<8x1xf32>
    %26 = vector.shape_cast %25 : vector<8x1xf32> to vector<8x1xf32>
    %27 = vector.broadcast %26 : vector<8x1xf32> to vector<8x512xf32>
    %28 = vector.extract_strided_slice %0 {offsets = [0, 9], sizes = [8, 1], strides = [1, 1]} : vector<8x11xf32> to vector<8x1xf32>
    %29 = vector.shape_cast %28 : vector<8x1xf32> to vector<8x1xf32>
    %30 = vector.broadcast %29 : vector<8x1xf32> to vector<8x512xf32>
    %31 = vector.extract_strided_slice %0 {offsets = [0, 10], sizes = [8, 1], strides = [1, 1]} : vector<8x11xf32> to vector<8x1xf32>
    %32 = vector.shape_cast %31 : vector<8x1xf32> to vector<8x1xf32>
    %33 = vector.broadcast %32 : vector<8x1xf32> to vector<8x512xf32>
    %c0_1 = arith.constant 0 : index
    %c0_2 = arith.constant 0 : index
    %c0_3 = arith.constant 0 : index
    %34 = vector.load %arg6[%c0_1, %c0_2, %c0_3] : memref<8x1x512xf32, #tpu.memory_space<vmem>>, vector<1x1x512xf32>
    %35 = vector.shape_cast %34 : vector<1x1x512xf32> to vector<1x512xf32>
    %36 = vector.shape_cast %35 : vector<1x512xf32> to vector<1x512xf32>
    %37 = vector.broadcast %36 : vector<1x512xf32> to vector<8x512xf32>
    %c1 = arith.constant 1 : index
    %c0_4 = arith.constant 0 : index
    %c0_5 = arith.constant 0 : index
    %38 = vector.load %arg6[%c1, %c0_4, %c0_5] : memref<8x1x512xf32, #tpu.memory_space<vmem>>, vector<1x1x512xf32>
    %39 = vector.shape_cast %38 : vector<1x1x512xf32> to vector<1x512xf32>
    %40 = vector.shape_cast %39 : vector<1x512xf32> to vector<1x512xf32>
    %41 = vector.broadcast %40 : vector<1x512xf32> to vector<8x512xf32>
    %c2 = arith.constant 2 : index
    %c0_6 = arith.constant 0 : index
    %c0_7 = arith.constant 0 : index
    %42 = vector.load %arg6[%c2, %c0_6, %c0_7] : memref<8x1x512xf32, #tpu.memory_space<vmem>>, vector<1x1x512xf32>
    %43 = vector.shape_cast %42 : vector<1x1x512xf32> to vector<1x512xf32>
    %44 = vector.shape_cast %43 : vector<1x512xf32> to vector<1x512xf32>
    %45 = vector.broadcast %44 : vector<1x512xf32> to vector<8x512xf32>
    %c3 = arith.constant 3 : index
    %c0_8 = arith.constant 0 : index
    %c0_9 = arith.constant 0 : index
    %46 = vector.load %arg6[%c3, %c0_8, %c0_9] : memref<8x1x512xf32, #tpu.memory_space<vmem>>, vector<1x1x512xf32>
    %47 = vector.shape_cast %46 : vector<1x1x512xf32> to vector<1x512xf32>
    %48 = vector.shape_cast %47 : vector<1x512xf32> to vector<1x512xf32>
    %49 = vector.broadcast %48 : vector<1x512xf32> to vector<8x512xf32>
    %c4 = arith.constant 4 : index
    %c0_10 = arith.constant 0 : index
    %c0_11 = arith.constant 0 : index
    %50 = vector.load %arg6[%c4, %c0_10, %c0_11] : memref<8x1x512xf32, #tpu.memory_space<vmem>>, vector<1x1x512xf32>
    %51 = vector.shape_cast %50 : vector<1x1x512xf32> to vector<1x512xf32>
    %52 = vector.shape_cast %51 : vector<1x512xf32> to vector<1x512xf32>
    %53 = vector.broadcast %52 : vector<1x512xf32> to vector<8x512xf32>
    %c5 = arith.constant 5 : index
    %c0_12 = arith.constant 0 : index
    %c0_13 = arith.constant 0 : index
    %54 = vector.load %arg6[%c5, %c0_12, %c0_13] : memref<8x1x512xf32, #tpu.memory_space<vmem>>, vector<1x1x512xf32>
    %55 = vector.shape_cast %54 : vector<1x1x512xf32> to vector<1x512xf32>
    %56 = vector.shape_cast %55 : vector<1x512xf32> to vector<1x512xf32>
    %57 = vector.broadcast %56 : vector<1x512xf32> to vector<8x512xf32>
    %c6 = arith.constant 6 : index
    %c0_14 = arith.constant 0 : index
    %c0_15 = arith.constant 0 : index
    %58 = vector.load %arg6[%c6, %c0_14, %c0_15] : memref<8x1x512xf32, #tpu.memory_space<vmem>>, vector<1x1x512xf32>
    %59 = vector.shape_cast %58 : vector<1x1x512xf32> to vector<1x512xf32>
    %60 = vector.shape_cast %59 : vector<1x512xf32> to vector<1x512xf32>
    %61 = vector.broadcast %60 : vector<1x512xf32> to vector<8x512xf32>
    %c7 = arith.constant 7 : index
    %c0_16 = arith.constant 0 : index
    %c0_17 = arith.constant 0 : index
    %62 = vector.load %arg6[%c7, %c0_16, %c0_17] : memref<8x1x512xf32, #tpu.memory_space<vmem>>, vector<1x1x512xf32>
    %63 = vector.shape_cast %62 : vector<1x1x512xf32> to vector<1x512xf32>
    %64 = vector.shape_cast %63 : vector<1x512xf32> to vector<1x512xf32>
    %65 = vector.broadcast %64 : vector<1x512xf32> to vector<8x512xf32>
    %c0_18 = arith.constant 0 : index
    %c0_19 = arith.constant 0 : index
    %66 = vector.load %arg3[%c0_18, %c0_19] : memref<8x6xf32, #tpu.memory_space<vmem>>, vector<8x6xf32>
    %c0_20 = arith.constant 0 : index
    %c0_21 = arith.constant 0 : index
    %c0_22 = arith.constant 0 : index
    %67 = vector.load %arg1[%c0_20, %c0_21, %c0_22] : memref<1x6x2048xf32, #tpu.memory_space<vmem>>, vector<1x6x2048xf32>
    %68 = vector.shape_cast %67 : vector<1x6x2048xf32> to vector<6x2048xf32>
    %cst = arith.constant dense<0.000000e+00> : vector<8x2048xf32>
    %69 = tpu.matmul %66, %68, %cst {dimension_numbers = #tpu.dot_dimension_numbers<[1], [0], [0], [1], [0, 0, 1, 1], [], []>} : vector<8x6xf32>, vector<6x2048xf32>, vector<8x2048xf32> -> vector<8x2048xf32>
    %70 = arith.addf %69, %3 : vector<8x2048xf32>
    %c0_23 = arith.constant 0 : index
    %c0_24 = arith.constant 0 : index
    %71 = vector.load %arg4[%c0_23, %c0_24] : memref<8x5xf32, #tpu.memory_space<vmem>>, vector<8x5xf32>
    %c0_25 = arith.constant 0 : index
    %c0_26 = arith.constant 0 : index
    %c0_27 = arith.constant 0 : index
    %72 = vector.load %arg2[%c0_25, %c0_26, %c0_27] : memref<1x5x512xf32, #tpu.memory_space<vmem>>, vector<1x5x512xf32>
    %73 = vector.shape_cast %72 : vector<1x5x512xf32> to vector<5x512xf32>
    %cst_28 = arith.constant dense<0.000000e+00> : vector<8x512xf32>
    %74 = tpu.matmul %71, %73, %cst_28 {dimension_numbers = #tpu.dot_dimension_numbers<[1], [0], [0], [1], [0, 0, 1, 1], [], []>} : vector<8x5xf32>, vector<5x512xf32>, vector<8x512xf32> -> vector<8x512xf32>
    %75 = vector.extract_strided_slice %70 {offsets = [0, 0], sizes = [8, 512], strides = [1, 1]} : vector<8x2048xf32> to vector<8x512xf32>
    %76 = vector.extract_strided_slice %70 {offsets = [0, 512], sizes = [8, 512], strides = [1, 1]} : vector<8x2048xf32> to vector<8x512xf32>
    %77 = vector.extract_strided_slice %70 {offsets = [0, 1024], sizes = [8, 512], strides = [1, 1]} : vector<8x2048xf32> to vector<8x512xf32>
    %78 = vector.extract_strided_slice %70 {offsets = [0, 1536], sizes = [8, 512], strides = [1, 1]} : vector<8x2048xf32> to vector<8x512xf32>
    %c17_i32 = arith.constant 17 : i32
    %79 = tpu.dynamic_rotate %74 by %c17_i32 dim 1 : vector<8x512xf32>, i32 -> vector<8x512xf32>
    %80 = arith.mulf %79, %37 : vector<8x512xf32>
    %81 = arith.mulf %80, %9 : vector<8x512xf32>
    %82 = arith.addf %6, %81 : vector<8x512xf32>
    %c16_i32 = arith.constant 16 : i32
    %83 = tpu.dynamic_rotate %74 by %c16_i32 dim 1 : vector<8x512xf32>, i32 -> vector<8x512xf32>
    %84 = arith.mulf %83, %41 : vector<8x512xf32>
    %85 = arith.mulf %84, %12 : vector<8x512xf32>
    %86 = arith.addf %82, %85 : vector<8x512xf32>
    %c15_i32 = arith.constant 15 : i32
    %87 = tpu.dynamic_rotate %74 by %c15_i32 dim 1 : vector<8x512xf32>, i32 -> vector<8x512xf32>
    %88 = arith.mulf %87, %45 : vector<8x512xf32>
    %89 = arith.mulf %88, %15 : vector<8x512xf32>
    %90 = arith.addf %86, %89 : vector<8x512xf32>
    %c1_i32 = arith.constant 1 : i32
    %91 = tpu.dynamic_rotate %74 by %c1_i32 dim 1 : vector<8x512xf32>, i32 -> vector<8x512xf32>
    %92 = arith.mulf %91, %49 : vector<8x512xf32>
    %93 = arith.mulf %92, %18 : vector<8x512xf32>
    %94 = arith.addf %90, %93 : vector<8x512xf32>
    %95 = arith.mulf %74, %21 : vector<8x512xf32>
    %96 = arith.addf %94, %95 : vector<8x512xf32>
    %c511_i32 = arith.constant 511 : i32
    %97 = tpu.dynamic_rotate %74 by %c511_i32 dim 1 : vector<8x512xf32>, i32 -> vector<8x512xf32>
    %98 = arith.mulf %97, %53 : vector<8x512xf32>
    %99 = arith.mulf %98, %24 : vector<8x512xf32>
    %100 = arith.addf %96, %99 : vector<8x512xf32>
    %c497_i32 = arith.constant 497 : i32
    %101 = tpu.dynamic_rotate %74 by %c497_i32 dim 1 : vector<8x512xf32>, i32 -> vector<8x512xf32>
    %102 = arith.mulf %101, %57 : vector<8x512xf32>
    %103 = arith.mulf %102, %27 : vector<8x512xf32>
    %104 = arith.addf %100, %103 : vector<8x512xf32>
    %c496_i32 = arith.constant 496 : i32
    %105 = tpu.dynamic_rotate %74 by %c496_i32 dim 1 : vector<8x512xf32>, i32 -> vector<8x512xf32>
    %106 = arith.mulf %105, %61 : vector<8x512xf32>
    %107 = arith.mulf %106, %30 : vector<8x512xf32>
    %108 = arith.addf %104, %107 : vector<8x512xf32>
    %c495_i32 = arith.constant 495 : i32
    %109 = tpu.dynamic_rotate %74 by %c495_i32 dim 1 : vector<8x512xf32>, i32 -> vector<8x512xf32>
    %110 = arith.mulf %109, %65 : vector<8x512xf32>
    %111 = arith.mulf %110, %33 : vector<8x512xf32>
    %112 = arith.addf %108, %111 : vector<8x512xf32>
    %113 = arith.addf %112, %6 : vector<8x512xf32>
    %c17_i32_29 = arith.constant 17 : i32
    %114 = tpu.dynamic_rotate %78 by %c17_i32_29 dim 1 : vector<8x512xf32>, i32 -> vector<8x512xf32>
    %115 = arith.mulf %114, %37 : vector<8x512xf32>
    %116 = arith.mulf %115, %9 : vector<8x512xf32>
    %117 = arith.addf %113, %116 : vector<8x512xf32>
    %c16_i32_30 = arith.constant 16 : i32
    %118 = tpu.dynamic_rotate %77 by %c16_i32_30 dim 1 : vector<8x512xf32>, i32 -> vector<8x512xf32>
    %119 = arith.mulf %118, %41 : vector<8x512xf32>
    %120 = arith.mulf %119, %12 : vector<8x512xf32>
    %121 = arith.addf %117, %120 : vector<8x512xf32>
    %122 = arith.mulf %119, %9 : vector<8x512xf32>
    %123 = arith.addf %113, %122 : vector<8x512xf32>
    %c16_i32_31 = arith.constant 16 : i32
    %124 = tpu.dynamic_rotate %78 by %c16_i32_31 dim 1 : vector<8x512xf32>, i32 -> vector<8x512xf32>
    %125 = arith.mulf %124, %41 : vector<8x512xf32>
    %126 = arith.mulf %125, %15 : vector<8x512xf32>
    %127 = arith.addf %121, %126 : vector<8x512xf32>
    %128 = arith.mulf %125, %12 : vector<8x512xf32>
    %129 = arith.addf %123, %128 : vector<8x512xf32>
    %c15_i32_32 = arith.constant 15 : i32
    %130 = tpu.dynamic_rotate %77 by %c15_i32_32 dim 1 : vector<8x512xf32>, i32 -> vector<8x512xf32>
    %131 = arith.mulf %130, %45 : vector<8x512xf32>
    %132 = arith.mulf %131, %15 : vector<8x512xf32>
    %133 = arith.addf %129, %132 : vector<8x512xf32>
    %c1_i32_33 = arith.constant 1 : i32
    %134 = tpu.dynamic_rotate %76 by %c1_i32_33 dim 1 : vector<8x512xf32>, i32 -> vector<8x512xf32>
    %135 = arith.mulf %134, %49 : vector<8x512xf32>
    %136 = arith.mulf %135, %18 : vector<8x512xf32>
    %137 = arith.addf %127, %136 : vector<8x512xf32>
    %138 = arith.mulf %135, %9 : vector<8x512xf32>
    %139 = arith.addf %113, %138 : vector<8x512xf32>
    %140 = arith.mulf %75, %21 : vector<8x512xf32>
    %141 = arith.addf %137, %140 : vector<8x512xf32>
    %142 = arith.mulf %75, %18 : vector<8x512xf32>
    %143 = arith.addf %133, %142 : vector<8x512xf32>
    %144 = arith.mulf %75, %12 : vector<8x512xf32>
    %145 = arith.addf %139, %144 : vector<8x512xf32>
    %146 = arith.mulf %75, %9 : vector<8x512xf32>
    %147 = arith.addf %113, %146 : vector<8x512xf32>
    %148 = arith.mulf %76, %24 : vector<8x512xf32>
    %149 = arith.addf %141, %148 : vector<8x512xf32>
    %150 = arith.mulf %76, %21 : vector<8x512xf32>
    %151 = arith.addf %143, %150 : vector<8x512xf32>
    %152 = arith.mulf %76, %15 : vector<8x512xf32>
    %153 = arith.addf %145, %152 : vector<8x512xf32>
    %154 = arith.mulf %76, %12 : vector<8x512xf32>
    %155 = arith.addf %147, %154 : vector<8x512xf32>
    %c511_i32_34 = arith.constant 511 : i32
    %156 = tpu.dynamic_rotate %75 by %c511_i32_34 dim 1 : vector<8x512xf32>, i32 -> vector<8x512xf32>
    %157 = arith.mulf %156, %53 : vector<8x512xf32>
    %158 = arith.mulf %157, %24 : vector<8x512xf32>
    %159 = arith.addf %151, %158 : vector<8x512xf32>
    %160 = arith.mulf %157, %15 : vector<8x512xf32>
    %161 = arith.addf %155, %160 : vector<8x512xf32>
    %c1_i32_35 = arith.constant 1 : i32
    %162 = tpu.dynamic_rotate %78 by %c1_i32_35 dim 1 : vector<8x512xf32>, i32 -> vector<8x512xf32>
    %163 = arith.mulf %162, %49 : vector<8x512xf32>
    %164 = arith.mulf %163, %27 : vector<8x512xf32>
    %165 = arith.addf %149, %164 : vector<8x512xf32>
    %166 = arith.mulf %163, %18 : vector<8x512xf32>
    %167 = arith.addf %153, %166 : vector<8x512xf32>
    %168 = arith.mulf %77, %30 : vector<8x512xf32>
    %169 = arith.addf %165, %168 : vector<8x512xf32>
    %170 = arith.mulf %77, %27 : vector<8x512xf32>
    %171 = arith.addf %159, %170 : vector<8x512xf32>
    %172 = arith.mulf %77, %21 : vector<8x512xf32>
    %173 = arith.addf %167, %172 : vector<8x512xf32>
    %174 = arith.mulf %77, %18 : vector<8x512xf32>
    %175 = arith.addf %161, %174 : vector<8x512xf32>
    %176 = arith.mulf %78, %33 : vector<8x512xf32>
    %177 = arith.addf %169, %176 : vector<8x512xf32>
    %178 = arith.mulf %78, %30 : vector<8x512xf32>
    %179 = arith.addf %171, %178 : vector<8x512xf32>
    %180 = arith.mulf %78, %24 : vector<8x512xf32>
    %181 = arith.addf %173, %180 : vector<8x512xf32>
    %182 = arith.mulf %78, %21 : vector<8x512xf32>
    %183 = arith.addf %175, %182 : vector<8x512xf32>
    %c511_i32_36 = arith.constant 511 : i32
    %184 = tpu.dynamic_rotate %77 by %c511_i32_36 dim 1 : vector<8x512xf32>, i32 -> vector<8x512xf32>
    %185 = arith.mulf %184, %53 : vector<8x512xf32>
    %186 = arith.mulf %185, %33 : vector<8x512xf32>
    %187 = arith.addf %179, %186 : vector<8x512xf32>
    %188 = arith.mulf %185, %24 : vector<8x512xf32>
    %189 = arith.addf %183, %188 : vector<8x512xf32>
    %c497_i32_37 = arith.constant 497 : i32
    %190 = tpu.dynamic_rotate %76 by %c497_i32_37 dim 1 : vector<8x512xf32>, i32 -> vector<8x512xf32>
    %191 = arith.mulf %190, %57 : vector<8x512xf32>
    %192 = arith.mulf %191, %27 : vector<8x512xf32>
    %193 = arith.addf %181, %192 : vector<8x512xf32>
    %c496_i32_38 = arith.constant 496 : i32
    %194 = tpu.dynamic_rotate %75 by %c496_i32_38 dim 1 : vector<8x512xf32>, i32 -> vector<8x512xf32>
    %195 = arith.mulf %194, %61 : vector<8x512xf32>
    %196 = arith.mulf %195, %30 : vector<8x512xf32>
    %197 = arith.addf %193, %196 : vector<8x512xf32>
    %198 = arith.mulf %195, %27 : vector<8x512xf32>
    %199 = arith.addf %189, %198 : vector<8x512xf32>
    %c496_i32_39 = arith.constant 496 : i32
    %200 = tpu.dynamic_rotate %76 by %c496_i32_39 dim 1 : vector<8x512xf32>, i32 -> vector<8x512xf32>
    %201 = arith.mulf %200, %61 : vector<8x512xf32>
    %202 = arith.mulf %201, %33 : vector<8x512xf32>
    %203 = arith.addf %197, %202 : vector<8x512xf32>
    %204 = arith.mulf %201, %30 : vector<8x512xf32>
    %205 = arith.addf %199, %204 : vector<8x512xf32>
    %c495_i32_40 = arith.constant 495 : i32
    %206 = tpu.dynamic_rotate %75 by %c495_i32_40 dim 1 : vector<8x512xf32>, i32 -> vector<8x512xf32>
    %207 = arith.mulf %206, %65 : vector<8x512xf32>
    %208 = arith.mulf %207, %33 : vector<8x512xf32>
    %209 = arith.addf %205, %208 : vector<8x512xf32>
    %c0_41 = arith.constant 0 : index
    %c0_42 = arith.constant 0 : index
    %c0_43 = arith.constant 0 : index
    %c0_44 = arith.constant 0 : index
    %210 = vector.load %arg7[%c0_41, %c0_42, %c0_43, %c0_44] : memref<1x4x8x512xf32, #tpu.memory_space<vmem>>, vector<1x1x8x512xf32>
    %211 = vector.shape_cast %210 : vector<1x1x8x512xf32> to vector<8x512xf32>
    %212 = vector.shape_cast %177 : vector<8x512xf32> to vector<1x1x8x512xf32>
    tpu.vector_store %arg7[%c0_41, %c0_42, %c0_43, %c0_44], %212 {strides = array<i32>} : memref<1x4x8x512xf32, #tpu.memory_space<vmem>>, vector<1x1x8x512xf32>,
    %c0_45 = arith.constant 0 : index
    %c1_46 = arith.constant 1 : index
    %c0_47 = arith.constant 0 : index
    %c0_48 = arith.constant 0 : index
    %213 = vector.load %arg7[%c0_45, %c1_46, %c0_47, %c0_48] : memref<1x4x8x512xf32, #tpu.memory_space<vmem>>, vector<1x1x8x512xf32>
    %214 = vector.shape_cast %213 : vector<1x1x8x512xf32> to vector<8x512xf32>
    %215 = vector.shape_cast %187 : vector<8x512xf32> to vector<1x1x8x512xf32>
    tpu.vector_store %arg7[%c0_45, %c1_46, %c0_47, %c0_48], %215 {strides = array<i32>} : memref<1x4x8x512xf32, #tpu.memory_space<vmem>>, vector<1x1x8x512xf32>,
    %c0_49 = arith.constant 0 : index
    %c2_50 = arith.constant 2 : index
    %c0_51 = arith.constant 0 : index
    %c0_52 = arith.constant 0 : index
    %216 = vector.load %arg7[%c0_49, %c2_50, %c0_51, %c0_52] : memref<1x4x8x512xf32, #tpu.memory_space<vmem>>, vector<1x1x8x512xf32>
    %217 = vector.shape_cast %216 : vector<1x1x8x512xf32> to vector<8x512xf32>
    %218 = vector.shape_cast %203 : vector<8x512xf32> to vector<1x1x8x512xf32>
    tpu.vector_store %arg7[%c0_49, %c2_50, %c0_51, %c0_52], %218 {strides = array<i32>} : memref<1x4x8x512xf32, #tpu.memory_space<vmem>>, vector<1x1x8x512xf32>,
    %c0_53 = arith.constant 0 : index
    %c3_54 = arith.constant 3 : index
    %c0_55 = arith.constant 0 : index
    %c0_56 = arith.constant 0 : index
    %219 = vector.load %arg7[%c0_53, %c3_54, %c0_55, %c0_56] : memref<1x4x8x512xf32, #tpu.memory_space<vmem>>, vector<1x1x8x512xf32>
    %220 = vector.shape_cast %219 : vector<1x1x8x512xf32> to vector<8x512xf32>
    %221 = vector.shape_cast %209 : vector<8x512xf32> to vector<1x1x8x512xf32>
    tpu.vector_store %arg7[%c0_53, %c3_54, %c0_55, %c0_56], %221 {strides = array<i32>} : memref<1x4x8x512xf32, #tpu.memory_space<vmem>>, vector<1x1x8x512xf32>,
    return
  }
  func.func @transform_0(%arg0: i32) -> (i32, i32, i32) {
    %c0_i32 = arith.constant 0 : i32
    %c0_i32_0 = arith.constant 0 : i32
    %c0_i32_1 = arith.constant 0 : i32
    return %arg0, %c0_i32, %c0_i32_0 : i32, i32, i32
  }
  func.func @transform_1(%arg0: i32) -> (i32, i32, i32) {
    %c0_i32 = arith.constant 0 : i32
    %c0_i32_0 = arith.constant 0 : i32
    %c0_i32_1 = arith.constant 0 : i32
    return %arg0, %c0_i32, %c0_i32_0 : i32, i32, i32
  }
  func.func @transform_2(%arg0: i32) -> (i32, i32) {
    %c0_i32 = arith.constant 0 : i32
    %c0_i32_0 = arith.constant 0 : i32
    %c0_i32_1 = arith.constant 0 : i32
    return %c0_i32, %c0_i32_0 : i32, i32
  }
  func.func @transform_3(%arg0: i32) -> (i32, i32) {
    %c0_i32 = arith.constant 0 : i32
    %c0_i32_0 = arith.constant 0 : i32
    %c0_i32_1 = arith.constant 0 : i32
    return %c0_i32, %c0_i32_0 : i32, i32
  }
  func.func @transform_4(%arg0: i32) -> (i32, i32) {
    %c0_i32 = arith.constant 0 : i32
    %c0_i32_0 = arith.constant 0 : i32
    %c0_i32_1 = arith.constant 0 : i32
    return %c0_i32, %c0_i32_0 : i32, i32
  }
  func.func @transform_5(%arg0: i32) -> (i32, i32, i32) {
    %c0_i32 = arith.constant 0 : i32
    %c0_i32_0 = arith.constant 0 : i32
    %c0_i32_1 = arith.constant 0 : i32
    %c0_i32_2 = arith.constant 0 : i32
    return %c0_i32, %c0_i32_0, %c0_i32_1 : i32, i32, i32
  }
  func.func @transform_6(%arg0: i32) -> (i32, i32, i32, i32) {
    %c0_i32 = arith.constant 0 : i32
    %c0_i32_0 = arith.constant 0 : i32
    %c0_i32_1 = arith.constant 0 : i32
    %c0_i32_2 = arith.constant 0 : i32
    return %arg0, %c0_i32, %c0_i32_0, %c0_i32_1 : i32, i32, i32, i32
  }
}

</mosaic_0001>

<llo_original>
// kernel: semi_shift_depthwise.1
$region0: #{semi_shift_depthwise.1}
  #allocation0 [shape = 'u32[]', space=smem, size = 0x4, offset = 0x4, fixed_abs, tag = 'smem constant byte address 0x4 - core index']
  #allocation1 [shape = 'u32[144,128]{1,0:T(1,128)}', space=vmem, size = 0x12000, scoped, tag = 'internal scratch']
  %s0 = inlined_call_operand.vmem [shape: f32[1,6,2048], index: 0, kind: input, shape index: {}]
  %s1 = inlined_call_operand.vmem [shape: f32[1,5,512], index: 1, kind: input, shape index: {}]
  %s2 = inlined_call_operand.vmem [shape: f32[8,6], index: 2, kind: input, shape index: {}]
  %s3 = inlined_call_operand.vmem [shape: f32[8,5], index: 3, kind: input, shape index: {}]
  %s4 = inlined_call_operand.vmem [shape: f32[8,11], index: 4, kind: input, shape index: {}]
  %s5 = inlined_call_operand.vmem [shape: f32[8,1,512], index: 5, kind: input, shape index: {}]
  %s6 = inlined_call_operand.vmem [shape: f32[1,4,8,512], index: 6, kind: output, shape index: {}]
  %s7 = sld [smem:[#allocation0]]
  $region34: #{semi_shift_depthwise.1} parent=0
    _
  %s9 = ssub.s32 1, %s7
  %s10 = scalar_select 0, %s9, %s7
  // Predicated region
  $region2: #{semi_shift_depthwise.1} parent=0 // pred_check
    _
  $region3: #{semi_shift_depthwise.1} parent=0 // pred_check_branch
    %12 = sbr.rel (0) target = $region5
  $region4: #{semi_shift_depthwise.1} parent=0 // pred_region
    _
  $region5: #{semi_shift_depthwise.1} parent=0 // pred_fallthru
    _
  // Predicated region
  $region6: #{semi_shift_depthwise.1} parent=0 // pred_check
    _
  $region7: #{semi_shift_depthwise.1} parent=0 // pred_check_branch
    %14 = sbr.rel (0) target = $region9
  $region8: #{semi_shift_depthwise.1} parent=0 // pred_region
    _
  $region9: #{semi_shift_depthwise.1} parent=0 // pred_fallthru
    _
  // Predicated region
  $region10: #{semi_shift_depthwise.1} parent=0 // pred_check
    _
  $region11: #{semi_shift_depthwise.1} parent=0 // pred_check_branch
    %16 = sbr.rel (0) target = $region13
  $region12: #{semi_shift_depthwise.1} parent=0 // pred_region
    _
  $region13: #{semi_shift_depthwise.1} parent=0 // pred_fallthru
    _
  // Predicated region
  $region14: #{semi_shift_depthwise.1} parent=0 // pred_check
    _
  $region15: #{semi_shift_depthwise.1} parent=0 // pred_check_branch
    %18 = sbr.rel (0) target = $region17
  $region16: #{semi_shift_depthwise.1} parent=0 // pred_region
    _
  $region17: #{semi_shift_depthwise.1} parent=0 // pred_fallthru
    _
  // Predicated region
  $region18: #{semi_shift_depthwise.1} parent=0 // pred_check
    _
  $region19: #{semi_shift_depthwise.1} parent=0 // pred_check_branch
    %20 = sbr.rel (0) target = $region21
  $region20: #{semi_shift_depthwise.1} parent=0 // pred_region
    _
  $region21: #{semi_shift_depthwise.1} parent=0 // pred_fallthru
    _
  // Predicated region
  $region22: #{semi_shift_depthwise.1} parent=0 // pred_check
    _
  $region23: #{semi_shift_depthwise.1} parent=0 // pred_check_branch
    %22 = sbr.rel (0) target = $region25
  $region24: #{semi_shift_depthwise.1} parent=0 // pred_region
    _
  $region25: #{semi_shift_depthwise.1} parent=0 // pred_fallthru
    _
  %v23 = vld [vmem:[%s4] sm:$0xff]
  %25 = vset.pattern.permute.xlu0 0
  %26 = vperm.xlu0 %25, %v23
  %v27 = vpop.permute.xlu0 %26
  %29 = vset.pattern.permute.xlu0 1
  %30 = vperm.xlu0 %29, %v23
  %v31 = vpop.permute.xlu0 %30
  %33 = vset.pattern.permute.xlu0 2
  %34 = vperm.xlu0 %33, %v23
  %v35 = vpop.permute.xlu0 %34
  %37 = vset.pattern.permute.xlu0 3
  %38 = vperm.xlu0 %37, %v23
  %v39 = vpop.permute.xlu0 %38
  %41 = vset.pattern.permute.xlu0 4
  %42 = vperm.xlu0 %41, %v23
  %v43 = vpop.permute.xlu0 %42
  %45 = vset.pattern.permute.xlu0 5
  %46 = vperm.xlu0 %45, %v23
  %v47 = vpop.permute.xlu0 %46
  %49 = vset.pattern.permute.xlu0 6
  %50 = vperm.xlu0 %49, %v23
  %v51 = vpop.permute.xlu0 %50
  %53 = vset.pattern.permute.xlu0 7
  %54 = vperm.xlu0 %53, %v23
  %v55 = vpop.permute.xlu0 %54
  %57 = vset.pattern.permute.xlu0 8
  %58 = vperm.xlu0 %57, %v23
  %v59 = vpop.permute.xlu0 %58
  %61 = vset.pattern.permute.xlu0 9
  %62 = vperm.xlu0 %61, %v23
  %v63 = vpop.permute.xlu0 %62
  %65 = vset.pattern.permute.xlu0 10
  %66 = vperm.xlu0 %65, %v23
  %v67 = vpop.permute.xlu0 %66
  %v69 = vld [vmem:[%s5] sm:$0xf]
  %v71 = vlaneseq
  %v72 = vshrl.u32 %v71, 7
  %v73 = vsub.s32 0, %v72
  %v74 = vrot.slane %v69, %v73
  %v75 = vlaneseq
  %v76 = vshrl.u32 %v75, 7
  %v77 = vsub.s32 1, %v76
  %v78 = vrot.slane %v69, %v77
  %v79 = vlaneseq
  %v80 = vshrl.u32 %v79, 7
  %v81 = vsub.s32 2, %v80
  %v82 = vrot.slane %v69, %v81
  %v83 = vlaneseq
  %v84 = vshrl.u32 %v83, 7
  %v85 = vsub.s32 3, %v84
  %v86 = vrot.slane %v69, %v85
  %s91 = scalar_lea.vmem %s5, 4
  %v92 = vld [vmem:[%s91] sm:$0xf]
  %v94 = vlaneseq
  %v95 = vshrl.u32 %v94, 7
  %v96 = vsub.s32 0, %v95
  %v97 = vrot.slane %v92, %v96
  %v98 = vlaneseq
  %v99 = vshrl.u32 %v98, 7
  %v100 = vsub.s32 1, %v99
  %v101 = vrot.slane %v92, %v100
  %v102 = vlaneseq
  %v103 = vshrl.u32 %v102, 7
  %v104 = vsub.s32 2, %v103
  %v105 = vrot.slane %v92, %v104
  %v106 = vlaneseq
  %v107 = vshrl.u32 %v106, 7
  %v108 = vsub.s32 3, %v107
  %v109 = vrot.slane %v92, %v108
  %s114 = scalar_lea.vmem %s5, 8
  %v115 = vld [vmem:[%s114] sm:$0xf]
  %v117 = vlaneseq
  %v118 = vshrl.u32 %v117, 7
  %v119 = vsub.s32 0, %v118
  %v120 = vrot.slane %v115, %v119
  %v121 = vlaneseq
  %v122 = vshrl.u32 %v121, 7
  %v123 = vsub.s32 1, %v122
  %v124 = vrot.slane %v115, %v123
  %v125 = vlaneseq
  %v126 = vshrl.u32 %v125, 7
  %v127 = vsub.s32 2, %v126
  %v128 = vrot.slane %v115, %v127
  %v129 = vlaneseq
  %v130 = vshrl.u32 %v129, 7
  %v131 = vsub.s32 3, %v130
  %v132 = vrot.slane %v115, %v131
  %s137 = scalar_lea.vmem %s5, 12
  %v138 = vld [vmem:[%s137] sm:$0xf]
  %v140 = vlaneseq
  %v141 = vshrl.u32 %v140, 7
  %v142 = vsub.s32 0, %v141
  %v143 = vrot.slane %v138, %v142
  %v144 = vlaneseq
  %v145 = vshrl.u32 %v144, 7
  %v146 = vsub.s32 1, %v145
  %v147 = vrot.slane %v138, %v146
  %v148 = vlaneseq
  %v149 = vshrl.u32 %v148, 7
  %v150 = vsub.s32 2, %v149
  %v151 = vrot.slane %v138, %v150
  %v152 = vlaneseq
  %v153 = vshrl.u32 %v152, 7
  %v154 = vsub.s32 3, %v153
  %v155 = vrot.slane %v138, %v154
  %s160 = scalar_lea.vmem %s5, 16
  %v161 = vld [vmem:[%s160] sm:$0xf]
  %v163 = vlaneseq
  %v164 = vshrl.u32 %v163, 7
  %v165 = vsub.s32 0, %v164
  %v166 = vrot.slane %v161, %v165
  %v167 = vlaneseq
  %v168 = vshrl.u32 %v167, 7
  %v169 = vsub.s32 1, %v168
  %v170 = vrot.slane %v161, %v169
  %v171 = vlaneseq
  %v172 = vshrl.u32 %v171, 7
  %v173 = vsub.s32 2, %v172
  %v174 = vrot.slane %v161, %v173
  %v175 = vlaneseq
  %v176 = vshrl.u32 %v175, 7
  %v177 = vsub.s32 3, %v176
  %v178 = vrot.slane %v161, %v177
  %s183 = scalar_lea.vmem %s5, 20
  %v184 = vld [vmem:[%s183] sm:$0xf]
  %v186 = vlaneseq
  %v187 = vshrl.u32 %v186, 7
  %v188 = vsub.s32 0, %v187
  %v189 = vrot.slane %v184, %v188
  %v190 = vlaneseq
  %v191 = vshrl.u32 %v190, 7
  %v192 = vsub.s32 1, %v191
  %v193 = vrot.slane %v184, %v192
  %v194 = vlaneseq
  %v195 = vshrl.u32 %v194, 7
  %v196 = vsub.s32 2, %v195
  %v197 = vrot.slane %v184, %v196
  %v198 = vlaneseq
  %v199 = vshrl.u32 %v198, 7
  %v200 = vsub.s32 3, %v199
  %v201 = vrot.slane %v184, %v200
  %s206 = scalar_lea.vmem %s5, 24
  %v207 = vld [vmem:[%s206] sm:$0xf]
  %v209 = vlaneseq
  %v210 = vshrl.u32 %v209, 7
  %v211 = vsub.s32 0, %v210
  %v212 = vrot.slane %v207, %v211
  %v213 = vlaneseq
  %v214 = vshrl.u32 %v213, 7
  %v215 = vsub.s32 1, %v214
  %v216 = vrot.slane %v207, %v215
  %v217 = vlaneseq
  %v218 = vshrl.u32 %v217, 7
  %v219 = vsub.s32 2, %v218
  %v220 = vrot.slane %v207, %v219
  %v221 = vlaneseq
  %v222 = vshrl.u32 %v221, 7
  %v223 = vsub.s32 3, %v222
  %v224 = vrot.slane %v207, %v223
  %s229 = scalar_lea.vmem %s5, 28
  %v230 = vld [vmem:[%s229] sm:$0xf]
  %v232 = vlaneseq
  %v233 = vshrl.u32 %v232, 7
  %v234 = vsub.s32 0, %v233
  %v235 = vrot.slane %v230, %v234
  %v236 = vlaneseq
  %v237 = vshrl.u32 %v236, 7
  %v238 = vsub.s32 1, %v237
  %v239 = vrot.slane %v230, %v238
  %v240 = vlaneseq
  %v241 = vshrl.u32 %v240, 7
  %v242 = vsub.s32 2, %v241
  %v243 = vrot.slane %v230, %v242
  %v244 = vlaneseq
  %v245 = vshrl.u32 %v244, 7
  %v246 = vsub.s32 3, %v245
  %v247 = vrot.slane %v230, %v246
  %v252 = vld [vmem:[%s2] sm:$0xff]
  %v253 = vld [vmem:[%s0] sm:$0x3f]
  %v254 = vld [vmem:[%s0 + $0x8] sm:$0x3f]
  %v255 = vld [vmem:[%s0 + $0x10] sm:$0x3f]
  %v256 = vld [vmem:[%s0 + $0x18] sm:$0x3f]
  %v257 = vld [vmem:[%s0 + $0x20] sm:$0x3f]
  %v258 = vld [vmem:[%s0 + $0x28] sm:$0x3f]
  %v259 = vld [vmem:[%s0 + $0x30] sm:$0x3f]
  %v260 = vld [vmem:[%s0 + $0x38] sm:$0x3f]
  %v261 = vld [vmem:[%s0 + $0x40] sm:$0x3f]
  %v262 = vld [vmem:[%s0 + $0x48] sm:$0x3f]
  %v263 = vld [vmem:[%s0 + $0x50] sm:$0x3f]
  %v264 = vld [vmem:[%s0 + $0x58] sm:$0x3f]
  %v265 = vld [vmem:[%s0 + $0x60] sm:$0x3f]
  %v266 = vld [vmem:[%s0 + $0x68] sm:$0x3f]
  %v267 = vld [vmem:[%s0 + $0x70] sm:$0x3f]
  %v268 = vld [vmem:[%s0 + $0x78] sm:$0x3f]
  %vm269 = vcmask 48128
  %v271 = vsel %vm269, %v252, 0
  %vm273 = vcmask 1045504
  %v275 = vsel %vm273, %v253, 0
  %v278 = vsel %vm273, %v254, 0
  %v281 = vsel %vm273, %v255, 0
  %v284 = vsel %vm273, %v256, 0
  %v287 = vsel %vm273, %v257, 0
  %v290 = vsel %vm273, %v258, 0
  %v293 = vsel %vm273, %v259, 0
  %v296 = vsel %vm273, %v260, 0
  %v299 = vsel %vm273, %v261, 0
  %v302 = vsel %vm273, %v262, 0
  %v305 = vsel %vm273, %v263, 0
  %v308 = vsel %vm273, %v264, 0
  %v311 = vsel %vm273, %v265, 0
  %v314 = vsel %vm273, %v266, 0
  %v317 = vsel %vm273, %v267, 0
  %v320 = vsel %vm273, %v268, 0
  %322 = vmatprep.subr.mxu0 0.0
  %323 = vmatpush1.msra.mxu0 0.0
  %324 = vmatprep.subr.mxu0 0.0
  %325 = vmatpush1.msra.mxu0 0.0
  %326 = vmatprep.subr.mxu0 0.0
  %327 = vmatpush1.msra.mxu0 0.0
  %328 = vmatprep.subr.mxu0 0.0
  %329 = vmatpush1.msra.mxu0 0.0
  %330 = vmatprep.subr.mxu0 0.0
  %331 = vmatpush1.msra.mxu0 0.0
  %332 = vmatprep.subr.mxu0 0.0
  %333 = vmatpush1.msra.mxu0 0.0
  %334 = vmatprep.subr.mxu0 0.0
  %335 = vmatpush1.msra.mxu0 0.0
  %336 = vmatprep.subr.mxu0 0.0
  %337 = vmatpush1.msra.mxu0 0.0
  %338 = vmatprep.subr.mxu0 0.0
  %339 = vmatpush1.msra.mxu0 0.0
  %340 = vmatprep.subr.mxu0 0.0
  %341 = vmatpush1.msra.mxu0 0.0
  %342 = vmatprep.subr.mxu0 0.0
  %343 = vmatpush1.msra.mxu0 0.0
  %344 = vmatprep.subr.mxu0 0.0
  %345 = vmatpush1.msra.mxu0 0.0
  %346 = vmatprep.subr.mxu0 0.0
  %347 = vmatpush1.msra.mxu0 0.0
  %348 = vmatprep.subr.mxu0 0.0
  %349 = vmatpush1.msra.mxu0 0.0
  %350 = vmatprep.subr.mxu0 0.0
  %351 = vmatpush1.msra.mxu0 0.0
  %352 = vmatprep.subr.mxu0 %v278
  %353 = vmatpush1.msra.mxu0 %v275
  %354 = vmatprep.subr.mxu0 0.0
  %355 = vmatpush2.msra.mxu0 0.0
  %356 = vmatprep.subr.mxu0 0.0
  %357 = vmatpush2.msra.mxu0 0.0
  %358 = vmatprep.subr.mxu0 0.0
  %359 = vmatpush2.msra.mxu0 0.0
  %360 = vmatprep.subr.mxu0 0.0
  %361 = vmatpush2.msra.mxu0 0.0
  %362 = vmatprep.subr.mxu0 0.0
  %363 = vmatpush2.msra.mxu0 0.0
  %364 = vmatprep.subr.mxu0 0.0
  %365 = vmatpush2.msra.mxu0 0.0
  %366 = vmatprep.subr.mxu0 0.0
  %367 = vmatpush2.msra.mxu0 0.0
  %368 = vmatprep.subr.mxu0 0.0
  %369 = vmatpush2.msra.mxu0 0.0
  %370 = vmatprep.subr.mxu0 0.0
  %371 = vmatpush2.msra.mxu0 0.0
  %372 = vmatprep.subr.mxu0 0.0
  %373 = vmatpush2.msra.mxu0 0.0
  %374 = vmatprep.subr.mxu0 0.0
  %375 = vmatpush2.msra.mxu0 0.0
  %376 = vmatprep.subr.mxu0 0.0
  %377 = vmatpush2.msra.mxu0 0.0
  %378 = vmatprep.subr.mxu0 0.0
  %379 = vmatpush2.msra.mxu0 0.0
  %380 = vmatprep.subr.mxu0 0.0
  %381 = vmatpush2.msra.mxu0 0.0
  %382 = vmatprep.subr.mxu0 0.0
  %383 = vmatpush2.msra.mxu0 0.0
  %384 = vmatprep.subr.mxu0 0.0
  %385 = vmatpush2.msra.mxu0 0.0
  %386 = vmatprep.mubr.f32.mxu0 0.0
  %387 = vmatmul.mubr.f32.gmra.mxu0 %v271
  %v388 = vpop.f32.mrf.mxu0
  %v389 = vadd.f32 %v27, %v388
  %v390 = vpop.f32.mrf.mxu0
  %v391 = vadd.f32 %v27, %v390
  %392 = vdwg.mxu0
  %393 = vmatprep.subr.mxu0 0.0
  %394 = vmatpush1.msra.mxu0 0.0
  %395 = vmatprep.subr.mxu0 0.0
  %396 = vmatpush1.msra.mxu0 0.0
  %397 = vmatprep.subr.mxu0 0.0
  %398 = vmatpush1.msra.mxu0 0.0
  %399 = vmatprep.subr.mxu0 0.0
  %400 = vmatpush1.msra.mxu0 0.0
  %401 = vmatprep.subr.mxu0 0.0
  %402 = vmatpush1.msra.mxu0 0.0
  %403 = vmatprep.subr.mxu0 0.0
  %404 = vmatpush1.msra.mxu0 0.0
  %405 = vmatprep.subr.mxu0 0.0
  %406 = vmatpush1.msra.mxu0 0.0
  %407 = vmatprep.subr.mxu0 0.0
  %408 = vmatpush1.msra.mxu0 0.0
  %409 = vmatprep.subr.mxu0 0.0
  %410 = vmatpush1.msra.mxu0 0.0
  %411 = vmatprep.subr.mxu0 0.0
  %412 = vmatpush1.msra.mxu0 0.0
  %413 = vmatprep.subr.mxu0 0.0
  %414 = vmatpush1.msra.mxu0 0.0
  %415 = vmatprep.subr.mxu0 0.0
  %416 = vmatpush1.msra.mxu0 0.0
  %417 = vmatprep.subr.mxu0 0.0
  %418 = vmatpush1.msra.mxu0 0.0
  %419 = vmatprep.subr.mxu0 0.0
  %420 = vmatpush1.msra.mxu0 0.0
  %421 = vmatprep.subr.mxu0 0.0
  %422 = vmatpush1.msra.mxu0 0.0
  %423 = vmatprep.subr.mxu0 %v284
  %424 = vmatpush1.msra.mxu0 %v281
  %425 = vmatprep.subr.mxu0 0.0
  %426 = vmatpush2.msra.mxu0 0.0
  %427 = vmatprep.subr.mxu0 0.0
  %428 = vmatpush2.msra.mxu0 0.0
  %429 = vmatprep.subr.mxu0 0.0
  %430 = vmatpush2.msra.mxu0 0.0
  %431 = vmatprep.subr.mxu0 0.0
  %432 = vmatpush2.msra.mxu0 0.0
  %433 = vmatprep.subr.mxu0 0.0
  %434 = vmatpush2.msra.mxu0 0.0
  %435 = vmatprep.subr.mxu0 0.0
  %436 = vmatpush2.msra.mxu0 0.0
  %437 = vmatprep.subr.mxu0 0.0
  %438 = vmatpush2.msra.mxu0 0.0
  %439 = vmatprep.subr.mxu0 0.0
  %440 = vmatpush2.msra.mxu0 0.0
  %441 = vmatprep.subr.mxu0 0.0
  %442 = vmatpush2.msra.mxu0 0.0
  %443 = vmatprep.subr.mxu0 0.0
  %444 = vmatpush2.msra.mxu0 0.0
  %445 = vmatprep.subr.mxu0 0.0
  %446 = vmatpush2.msra.mxu0 0.0
  %447 = vmatprep.subr.mxu0 0.0
  %448 = vmatpush2.msra.mxu0 0.0
  %449 = vmatprep.subr.mxu0 0.0
  %450 = vmatpush2.msra.mxu0 0.0
  %451 = vmatprep.subr.mxu0 0.0
  %452 = vmatpush2.msra.mxu0 0.0
  %453 = vmatprep.subr.mxu0 0.0
  %454 = vmatpush2.msra.mxu0 0.0
  %455 = vmatprep.subr.mxu0 0.0
  %456 = vmatpush2.msra.mxu0 0.0
  %457 = vmatprep.mubr.f32.mxu0 0.0
  %458 = vmatmul.mubr.f32.gmra.mxu0 %v271
  %v459 = vpop.f32.mrf.mxu0
  %v460 = vadd.f32 %v27, %v459
  %v461 = vpop.f32.mrf.mxu0
  %v462 = vadd.f32 %v27, %v461
  %463 = vdwg.mxu0
  %464 = vmatprep.subr.mxu0 0.0
  %465 = vmatpush1.msra.mxu0 0.0
  %466 = vmatprep.subr.mxu0 0.0
  %467 = vmatpush1.msra.mxu0 0.0
  %468 = vmatprep.subr.mxu0 0.0
  %469 = vmatpush1.msra.mxu0 0.0
  %470 = vmatprep.subr.mxu0 0.0
  %471 = vmatpush1.msra.mxu0 0.0
  %472 = vmatprep.subr.mxu0 0.0
  %473 = vmatpush1.msra.mxu0 0.0
  %474 = vmatprep.subr.mxu0 0.0
  %475 = vmatpush1.msra.mxu0 0.0
  %476 = vmatprep.subr.mxu0 0.0
  %477 = vmatpush1.msra.mxu0 0.0
  %478 = vmatprep.subr.mxu0 0.0
  %479 = vmatpush1.msra.mxu0 0.0
  %480 = vmatprep.subr.mxu0 0.0
  %481 = vmatpush1.msra.mxu0 0.0
  %482 = vmatprep.subr.mxu0 0.0
  %483 = vmatpush1.msra.mxu0 0.0
  %484 = vmatprep.subr.mxu0 0.0
  %485 = vmatpush1.msra.mxu0 0.0
  %486 = vmatprep.subr.mxu0 0.0
  %487 = vmatpush1.msra.mxu0 0.0
  %488 = vmatprep.subr.mxu0 0.0
  %489 = vmatpush1.msra.mxu0 0.0
  %490 = vmatprep.subr.mxu0 0.0
  %491 = vmatpush1.msra.mxu0 0.0
  %492 = vmatprep.subr.mxu0 0.0
  %493 = vmatpush1.msra.mxu0 0.0
  %494 = vmatprep.subr.mxu0 %v290
  %495 = vmatpush1.msra.mxu0 %v287
  %496 = vmatprep.subr.mxu0 0.0
  %497 = vmatpush2.msra.mxu0 0.0
  %498 = vmatprep.subr.mxu0 0.0
  %499 = vmatpush2.msra.mxu0 0.0
  %500 = vmatprep.subr.mxu0 0.0
  %501 = vmatpush2.msra.mxu0 0.0
  %502 = vmatprep.subr.mxu0 0.0
  %503 = vmatpush2.msra.mxu0 0.0
  %504 = vmatprep.subr.mxu0 0.0
  %505 = vmatpush2.msra.mxu0 0.0
  %506 = vmatprep.subr.mxu0 0.0
  %507 = vmatpush2.msra.mxu0 0.0
  %508 = vmatprep.subr.mxu0 0.0
  %509 = vmatpush2.msra.mxu0 0.0
  %510 = vmatprep.subr.mxu0 0.0
  %511 = vmatpush2.msra.mxu0 0.0
  %512 = vmatprep.subr.mxu0 0.0
  %513 = vmatpush2.msra.mxu0 0.0
  %514 = vmatprep.subr.mxu0 0.0
  %515 = vmatpush2.msra.mxu0 0.0
  %516 = vmatprep.subr.mxu0 0.0
  %517 = vmatpush2.msra.mxu0 0.0
  %518 = vmatprep.subr.mxu0 0.0
  %519 = vmatpush2.msra.mxu0 0.0
  %520 = vmatprep.subr.mxu0 0.0
  %521 = vmatpush2.msra.mxu0 0.0
  %522 = vmatprep.subr.mxu0 0.0
  %523 = vmatpush2.msra.mxu0 0.0
  %524 = vmatprep.subr.mxu0 0.0
  %525 = vmatpush2.msra.mxu0 0.0
  %526 = vmatprep.subr.mxu0 0.0
  %527 = vmatpush2.msra.mxu0 0.0
  %528 = vmatprep.mubr.f32.mxu0 0.0
  %529 = vmatmul.mubr.f32.gmra.mxu0 %v271
  %v530 = vpop.f32.mrf.mxu0
  %v531 = vadd.f32 %v27, %v530
  %v532 = vpop.f32.mrf.mxu0
  %v533 = vadd.f32 %v27, %v532
  %534 = vdwg.mxu0
  %535 = vmatprep.subr.mxu0 0.0
  %536 = vmatpush1.msra.mxu0 0.0
  %537 = vmatprep.subr.mxu0 0.0
  %538 = vmatpush1.msra.mxu0 0.0
  %539 = vmatprep.subr.mxu0 0.0
  %540 = vmatpush1.msra.mxu0 0.0
  %541 = vmatprep.subr.mxu0 0.0
  %542 = vmatpush1.msra.mxu0 0.0
  %543 = vmatprep.subr.mxu0 0.0
  %544 = vmatpush1.msra.mxu0 0.0
  %545 = vmatprep.subr.mxu0 0.0
  %546 = vmatpush1.msra.mxu0 0.0
  %547 = vmatprep.subr.mxu0 0.0
  %548 = vmatpush1.msra.mxu0 0.0
  %549 = vmatprep.subr.mxu0 0.0
  %550 = vmatpush1.msra.mxu0 0.0
  %551 = vmatprep.subr.mxu0 0.0
  %552 = vmatpush1.msra.mxu0 0.0
  %553 = vmatprep.subr.mxu0 0.0
  %554 = vmatpush1.msra.mxu0 0.0
  %555 = vmatprep.subr.mxu0 0.0
  %556 = vmatpush1.msra.mxu0 0.0
  %557 = vmatprep.subr.mxu0 0.0
  %558 = vmatpush1.msra.mxu0 0.0
  %559 = vmatprep.subr.mxu0 0.0
  %560 = vmatpush1.msra.mxu0 0.0
  %561 = vmatprep.subr.mxu0 0.0
  %562 = vmatpush1.msra.mxu0 0.0
  %563 = vmatprep.subr.mxu0 0.0
  %564 = vmatpush1.msra.mxu0 0.0
  %565 = vmatprep.subr.mxu0 %v296
  %566 = vmatpush1.msra.mxu0 %v293
  %567 = vmatprep.subr.mxu0 0.0
  %568 = vmatpush2.msra.mxu0 0.0
  %569 = vmatprep.subr.mxu0 0.0
  %570 = vmatpush2.msra.mxu0 0.0
  %571 = vmatprep.subr.mxu0 0.0
  %572 = vmatpush2.msra.mxu0 0.0
  %573 = vmatprep.subr.mxu0 0.0
  %574 = vmatpush2.msra.mxu0 0.0
  %575 = vmatprep.subr.mxu0 0.0
  %576 = vmatpush2.msra.mxu0 0.0
  %577 = vmatprep.subr.mxu0 0.0
  %578 = vmatpush2.msra.mxu0 0.0
  %579 = vmatprep.subr.mxu0 0.0
  %580 = vmatpush2.msra.mxu0 0.0
  %581 = vmatprep.subr.mxu0 0.0
  %582 = vmatpush2.msra.mxu0 0.0
  %583 = vmatprep.subr.mxu0 0.0
  %584 = vmatpush2.msra.mxu0 0.0
  %585 = vmatprep.subr.mxu0 0.0
  %586 = vmatpush2.msra.mxu0 0.0
  %587 = vmatprep.subr.mxu0 0.0
  %588 = vmatpush2.msra.mxu0 0.0
  %589 = vmatprep.subr.mxu0 0.0
  %590 = vmatpush2.msra.mxu0 0.0
  %591 = vmatprep.subr.mxu0 0.0
  %592 = vmatpush2.msra.mxu0 0.0
  %593 = vmatprep.subr.mxu0 0.0
  %594 = vmatpush2.msra.mxu0 0.0
  %595 = vmatprep.subr.mxu0 0.0
  %596 = vmatpush2.msra.mxu0 0.0
  %597 = vmatprep.subr.mxu0 0.0
  %598 = vmatpush2.msra.mxu0 0.0
  %599 = vmatprep.mubr.f32.mxu0 0.0
  %600 = vmatmul.mubr.f32.gmra.mxu0 %v271
  %v601 = vpop.f32.mrf.mxu0
  %v602 = vadd.f32 %v27, %v601
  %v603 = vpop.f32.mrf.mxu0
  %v604 = vadd.f32 %v27, %v603
  %605 = vdwg.mxu0
  %606 = vmatprep.subr.mxu0 0.0
  %607 = vmatpush1.msra.mxu0 0.0
  %608 = vmatprep.subr.mxu0 0.0
  %609 = vmatpush1.msra.mxu0 0.0
  %610 = vmatprep.subr.mxu0 0.0
  %611 = vmatpush1.msra.mxu0 0.0
  %612 = vmatprep.subr.mxu0 0.0
  %613 = vmatpush1.msra.mxu0 0.0
  %614 = vmatprep.subr.mxu0 0.0
  %615 = vmatpush1.msra.mxu0 0.0
  %616 = vmatprep.subr.mxu0 0.0
  %617 = vmatpush1.msra.mxu0 0.0
  %618 = vmatprep.subr.mxu0 0.0
  %619 = vmatpush1.msra.mxu0 0.0
  %620 = vmatprep.subr.mxu0 0.0
  %621 = vmatpush1.msra.mxu0 0.0
  %622 = vmatprep.subr.mxu0 0.0
  %623 = vmatpush1.msra.mxu0 0.0
  %624 = vmatprep.subr.mxu0 0.0
  %625 = vmatpush1.msra.mxu0 0.0
  %626 = vmatprep.subr.mxu0 0.0
  %627 = vmatpush1.msra.mxu0 0.0
  %628 = vmatprep.subr.mxu0 0.0
  %629 = vmatpush1.msra.mxu0 0.0
  %630 = vmatprep.subr.mxu0 0.0
  %631 = vmatpush1.msra.mxu0 0.0
  %632 = vmatprep.subr.mxu0 0.0
  %633 = vmatpush1.msra.mxu0 0.0
  %634 = vmatprep.subr.mxu0 0.0
  %635 = vmatpush1.msra.mxu0 0.0
  %636 = vmatprep.subr.mxu0 %v302
  %637 = vmatpush1.msra.mxu0 %v299
  %638 = vmatprep.subr.mxu0 0.0
  %639 = vmatpush2.msra.mxu0 0.0
  %640 = vmatprep.subr.mxu0 0.0
  %641 = vmatpush2.msra.mxu0 0.0
  %642 = vmatprep.subr.mxu0 0.0
  %643 = vmatpush2.msra.mxu0 0.0
  %644 = vmatprep.subr.mxu0 0.0
  %645 = vmatpush2.msra.mxu0 0.0
  %646 = vmatprep.subr.mxu0 0.0
  %647 = vmatpush2.msra.mxu0 0.0
  %648 = vmatprep.subr.mxu0 0.0
  %649 = vmatpush2.msra.mxu0 0.0
  %650 = vmatprep.subr.mxu0 0.0
  %651 = vmatpush2.msra.mxu0 0.0
  %652 = vmatprep.subr.mxu0 0.0
  %653 = vmatpush2.msra.mxu0 0.0
  %654 = vmatprep.subr.mxu0 0.0
  %655 = vmatpush2.msra.mxu0 0.0
  %656 = vmatprep.subr.mxu0 0.0
  %657 = vmatpush2.msra.mxu0 0.0
  %658 = vmatprep.subr.mxu0 0.0
  %659 = vmatpush2.msra.mxu0 0.0
  %660 = vmatprep.subr.mxu0 0.0
  %661 = vmatpush2.msra.mxu0 0.0
  %662 = vmatprep.subr.mxu0 0.0
  %663 = vmatpush2.msra.mxu0 0.0
  %664 = vmatprep.subr.mxu0 0.0
  %665 = vmatpush2.msra.mxu0 0.0
  %666 = vmatprep.subr.mxu0 0.0
  %667 = vmatpush2.msra.mxu0 0.0
  %668 = vmatprep.subr.mxu0 0.0
  %669 = vmatpush2.msra.mxu0 0.0
  %670 = vmatprep.mubr.f32.mxu0 0.0
  %671 = vmatmul.mubr.f32.gmra.mxu0 %v271
  %v672 = vpop.f32.mrf.mxu0
  %v673 = vadd.f32 %v27, %v672
  %v674 = vpop.f32.mrf.mxu0
  %v675 = vadd.f32 %v27, %v674
  %676 = vdwg.mxu0
  %677 = vmatprep.subr.mxu0 0.0
  %678 = vmatpush1.msra.mxu0 0.0
  %679 = vmatprep.subr.mxu0 0.0
  %680 = vmatpush1.msra.mxu0 0.0
  %681 = vmatprep.subr.mxu0 0.0
  %682 = vmatpush1.msra.mxu0 0.0
  %683 = vmatprep.subr.mxu0 0.0
  %684 = vmatpush1.msra.mxu0 0.0
  %685 = vmatprep.subr.mxu0 0.0
  %686 = vmatpush1.msra.mxu0 0.0
  %687 = vmatprep.subr.mxu0 0.0
  %688 = vmatpush1.msra.mxu0 0.0
  %689 = vmatprep.subr.mxu0 0.0
  %690 = vmatpush1.msra.mxu0 0.0
  %691 = vmatprep.subr.mxu0 0.0
  %692 = vmatpush1.msra.mxu0 0.0
  %693 = vmatprep.subr.mxu0 0.0
  %694 = vmatpush1.msra.mxu0 0.0
  %695 = vmatprep.subr.mxu0 0.0
  %696 = vmatpush1.msra.mxu0 0.0
  %697 = vmatprep.subr.mxu0 0.0
  %698 = vmatpush1.msra.mxu0 0.0
  %699 = vmatprep.subr.mxu0 0.0
  %700 = vmatpush1.msra.mxu0 0.0
  %701 = vmatprep.subr.mxu0 0.0
  %702 = vmatpush1.msra.mxu0 0.0
  %703 = vmatprep.subr.mxu0 0.0
  %704 = vmatpush1.msra.mxu0 0.0
  %705 = vmatprep.subr.mxu0 0.0
  %706 = vmatpush1.msra.mxu0 0.0
  %707 = vmatprep.subr.mxu0 %v308
  %708 = vmatpush1.msra.mxu0 %v305
  %709 = vmatprep.subr.mxu0 0.0
  %710 = vmatpush2.msra.mxu0 0.0
  %711 = vmatprep.subr.mxu0 0.0
  %712 = vmatpush2.msra.mxu0 0.0
  %713 = vmatprep.subr.mxu0 0.0
  %714 = vmatpush2.msra.mxu0 0.0
  %715 = vmatprep.subr.mxu0 0.0
  %716 = vmatpush2.msra.mxu0 0.0
  %717 = vmatprep.subr.mxu0 0.0
  %718 = vmatpush2.msra.mxu0 0.0
  %719 = vmatprep.subr.mxu0 0.0
  %720 = vmatpush2.msra.mxu0 0.0
  %721 = vmatprep.subr.mxu0 0.0
  %722 = vmatpush2.msra.mxu0 0.0
  %723 = vmatprep.subr.mxu0 0.0
  %724 = vmatpush2.msra.mxu0 0.0
  %725 = vmatprep.subr.mxu0 0.0
  %726 = vmatpush2.msra.mxu0 0.0
  %727 = vmatprep.subr.mxu0 0.0
  %728 = vmatpush2.msra.mxu0 0.0
  %729 = vmatprep.subr.mxu0 0.0
  %730 = vmatpush2.msra.mxu0 0.0
  %731 = vmatprep.subr.mxu0 0.0
  %732 = vmatpush2.msra.mxu0 0.0
  %733 = vmatprep.subr.mxu0 0.0
  %734 = vmatpush2.msra.mxu0 0.0
  %735 = vmatprep.subr.mxu0 0.0
  %736 = vmatpush2.msra.mxu0 0.0
  %737 = vmatprep.subr.mxu0 0.0
  %738 = vmatpush2.msra.mxu0 0.0
  %739 = vmatprep.subr.mxu0 0.0
  %740 = vmatpush2.msra.mxu0 0.0
  %741 = vmatprep.mubr.f32.mxu0 0.0
  %742 = vmatmul.mubr.f32.gmra.mxu0 %v271
  %v743 = vpop.f32.mrf.mxu0
  %v744 = vadd.f32 %v27, %v743
  %v745 = vpop.f32.mrf.mxu0
  %v746 = vadd.f32 %v27, %v745
  %747 = vdwg.mxu0
  %748 = vmatprep.subr.mxu0 0.0
  %749 = vmatpush1.msra.mxu0 0.0
  %750 = vmatprep.subr.mxu0 0.0
  %751 = vmatpush1.msra.mxu0 0.0
  %752 = vmatprep.subr.mxu0 0.0
  %753 = vmatpush1.msra.mxu0 0.0
  %754 = vmatprep.subr.mxu0 0.0
  %755 = vmatpush1.msra.mxu0 0.0
  %756 = vmatprep.subr.mxu0 0.0
  %757 = vmatpush1.msra.mxu0 0.0
  %758 = vmatprep.subr.mxu0 0.0
  %759 = vmatpush1.msra.mxu0 0.0
  %760 = vmatprep.subr.mxu0 0.0
  %761 = vmatpush1.msra.mxu0 0.0
  %762 = vmatprep.subr.mxu0 0.0
  %763 = vmatpush1.msra.mxu0 0.0
  %764 = vmatprep.subr.mxu0 0.0
  %765 = vmatpush1.msra.mxu0 0.0
  %766 = vmatprep.subr.mxu0 0.0
  %767 = vmatpush1.msra.mxu0 0.0
  %768 = vmatprep.subr.mxu0 0.0
  %769 = vmatpush1.msra.mxu0 0.0
  %770 = vmatprep.subr.mxu0 0.0
  %771 = vmatpush1.msra.mxu0 0.0
  %772 = vmatprep.subr.mxu0 0.0
  %773 = vmatpush1.msra.mxu0 0.0
  %774 = vmatprep.subr.mxu0 0.0
  %775 = vmatpush1.msra.mxu0 0.0
  %776 = vmatprep.subr.mxu0 0.0
  %777 = vmatpush1.msra.mxu0 0.0
  %778 = vmatprep.subr.mxu0 %v314
  %779 = vmatpush1.msra.mxu0 %v311
  %780 = vmatprep.subr.mxu0 0.0
  %781 = vmatpush2.msra.mxu0 0.0
  %782 = vmatprep.subr.mxu0 0.0
  %783 = vmatpush2.msra.mxu0 0.0
  %784 = vmatprep.subr.mxu0 0.0
  %785 = vmatpush2.msra.mxu0 0.0
  %786 = vmatprep.subr.mxu0 0.0
  %787 = vmatpush2.msra.mxu0 0.0
  %788 = vmatprep.subr.mxu0 0.0
  %789 = vmatpush2.msra.mxu0 0.0
  %790 = vmatprep.subr.mxu0 0.0
  %791 = vmatpush2.msra.mxu0 0.0
  %792 = vmatprep.subr.mxu0 0.0
  %793 = vmatpush2.msra.mxu0 0.0
  %794 = vmatprep.subr.mxu0 0.0
  %795 = vmatpush2.msra.mxu0 0.0
  %796 = vmatprep.subr.mxu0 0.0
  %797 = vmatpush2.msra.mxu0 0.0
  %798 = vmatprep.subr.mxu0 0.0
  %799 = vmatpush2.msra.mxu0 0.0
  %800 = vmatprep.subr.mxu0 0.0
  %801 = vmatpush2.msra.mxu0 0.0
  %802 = vmatprep.subr.mxu0 0.0
  %803 = vmatpush2.msra.mxu0 0.0
  %804 = vmatprep.subr.mxu0 0.0
  %805 = vmatpush2.msra.mxu0 0.0
  %806 = vmatprep.subr.mxu0 0.0
  %807 = vmatpush2.msra.mxu0 0.0
  %808 = vmatprep.subr.mxu0 0.0
  %809 = vmatpush2.msra.mxu0 0.0
  %810 = vmatprep.subr.mxu0 0.0
  %811 = vmatpush2.msra.mxu0 0.0
  %812 = vmatprep.mubr.f32.mxu0 0.0
  %813 = vmatmul.mubr.f32.gmra.mxu0 %v271
  %v814 = vpop.f32.mrf.mxu0
  %v815 = vadd.f32 %v27, %v814
  %v816 = vpop.f32.mrf.mxu0
  %v817 = vadd.f32 %v27, %v816
  %818 = vdwg.mxu0
  %819 = vmatprep.subr.mxu0 0.0
  %820 = vmatpush1.msra.mxu0 0.0
  %821 = vmatprep.subr.mxu0 0.0
  %822 = vmatpush1.msra.mxu0 0.0
  %823 = vmatprep.subr.mxu0 0.0
  %824 = vmatpush1.msra.mxu0 0.0
  %825 = vmatprep.subr.mxu0 0.0
  %826 = vmatpush1.msra.mxu0 0.0
  %827 = vmatprep.subr.mxu0 0.0
  %828 = vmatpush1.msra.mxu0 0.0
  %829 = vmatprep.subr.mxu0 0.0
  %830 = vmatpush1.msra.mxu0 0.0
  %831 = vmatprep.subr.mxu0 0.0
  %832 = vmatpush1.msra.mxu0 0.0
  %833 = vmatprep.subr.mxu0 0.0
  %834 = vmatpush1.msra.mxu0 0.0
  %835 = vmatprep.subr.mxu0 0.0
  %836 = vmatpush1.msra.mxu0 0.0
  %837 = vmatprep.subr.mxu0 0.0
  %838 = vmatpush1.msra.mxu0 0.0
  %839 = vmatprep.subr.mxu0 0.0
  %840 = vmatpush1.msra.mxu0 0.0
  %841 = vmatprep.subr.mxu0 0.0
  %842 = vmatpush1.msra.mxu0 0.0
  %843 = vmatprep.subr.mxu0 0.0
  %844 = vmatpush1.msra.mxu0 0.0
  %845 = vmatprep.subr.mxu0 0.0
  %846 = vmatpush1.msra.mxu0 0.0
  %847 = vmatprep.subr.mxu0 0.0
  %848 = vmatpush1.msra.mxu0 0.0
  %849 = vmatprep.subr.mxu0 %v320
  %850 = vmatpush1.msra.mxu0 %v317
  %851 = vmatprep.subr.mxu0 0.0
  %852 = vmatpush2.msra.mxu0 0.0
  %853 = vmatprep.subr.mxu0 0.0
  %854 = vmatpush2.msra.mxu0 0.0
  %855 = vmatprep.subr.mxu0 0.0
  %856 = vmatpush2.msra.mxu0 0.0
  %857 = vmatprep.subr.mxu0 0.0
  %858 = vmatpush2.msra.mxu0 0.0
  %859 = vmatprep.subr.mxu0 0.0
  %860 = vmatpush2.msra.mxu0 0.0
  %861 = vmatprep.subr.mxu0 0.0
  %862 = vmatpush2.msra.mxu0 0.0
  %863 = vmatprep.subr.mxu0 0.0
  %864 = vmatpush2.msra.mxu0 0.0
  %865 = vmatprep.subr.mxu0 0.0
  %866 = vmatpush2.msra.mxu0 0.0
  %867 = vmatprep.subr.mxu0 0.0
  %868 = vmatpush2.msra.mxu0 0.0
  %869 = vmatprep.subr.mxu0 0.0
  %870 = vmatpush2.msra.mxu0 0.0
  %871 = vmatprep.subr.mxu0 0.0
  %872 = vmatpush2.msra.mxu0 0.0
  %873 = vmatprep.subr.mxu0 0.0
  %874 = vmatpush2.msra.mxu0 0.0
  %875 = vmatprep.subr.mxu0 0.0
  %876 = vmatpush2.msra.mxu0 0.0
  %877 = vmatprep.subr.mxu0 0.0
  %878 = vmatpush2.msra.mxu0 0.0
  %879 = vmatprep.subr.mxu0 0.0
  %880 = vmatpush2.msra.mxu0 0.0
  %881 = vmatprep.subr.mxu0 0.0
  %882 = vmatpush2.msra.mxu0 0.0
  %883 = vmatprep.mubr.f32.mxu0 0.0
  %884 = vmatmul.mubr.f32.gmra.mxu0 %v271
  %v885 = vpop.f32.mrf.mxu0
  %v886 = vadd.f32 %v27, %v885
  %v887 = vpop.f32.mrf.mxu0
  %v888 = vadd.f32 %v27, %v887
  %889 = vdwg.mxu0
  %v890 = vld [vmem:[%s3] sm:$0xff]
  %v891 = vld [vmem:[%s1] sm:$0x1f]
  %v892 = vld [vmem:[%s1 + $0x8] sm:$0x1f]
  %v893 = vld [vmem:[%s1 + $0x10] sm:$0x1f]
  %v894 = vld [vmem:[%s1 + $0x18] sm:$0x1f]
  %vm895 = vcmask 39936
  %v897 = vsel %vm895, %v890, 0
  %vm899 = vcmask 1044480
  %v901 = vsel %vm899, %v891, 0
  %v904 = vsel %vm899, %v892, 0
  %v907 = vsel %vm899, %v893, 0
  %v910 = vsel %vm899, %v894, 0
  %912 = vmatprep.subr.mxu0 0.0
  %913 = vmatpush1.msra.mxu0 0.0
  %914 = vmatprep.subr.mxu0 0.0
  %915 = vmatpush1.msra.mxu0 0.0
  %916 = vmatprep.subr.mxu0 0.0
  %917 = vmatpush1.msra.mxu0 0.0
  %918 = vmatprep.subr.mxu0 0.0
  %919 = vmatpush1.msra.mxu0 0.0
  %920 = vmatprep.subr.mxu0 0.0
  %921 = vmatpush1.msra.mxu0 0.0
  %922 = vmatprep.subr.mxu0 0.0
  %923 = vmatpush1.msra.mxu0 0.0
  %924 = vmatprep.subr.mxu0 0.0
  %925 = vmatpush1.msra.mxu0 0.0
  %926 = vmatprep.subr.mxu0 0.0
  %927 = vmatpush1.msra.mxu0 0.0
  %928 = vmatprep.subr.mxu0 0.0
  %929 = vmatpush1.msra.mxu0 0.0
  %930 = vmatprep.subr.mxu0 0.0
  %931 = vmatpush1.msra.mxu0 0.0
  %932 = vmatprep.subr.mxu0 0.0
  %933 = vmatpush1.msra.mxu0 0.0
  %934 = vmatprep.subr.mxu0 0.0
  %935 = vmatpush1.msra.mxu0 0.0
  %936 = vmatprep.subr.mxu0 0.0
  %937 = vmatpush1.msra.mxu0 0.0
  %938 = vmatprep.subr.mxu0 0.0
  %939 = vmatpush1.msra.mxu0 0.0
  %940 = vmatprep.subr.mxu0 0.0
  %941 = vmatpush1.msra.mxu0 0.0
  %942 = vmatprep.subr.mxu0 %v904
  %943 = vmatpush1.msra.mxu0 %v901
  %944 = vmatprep.subr.mxu0 0.0
  %945 = vmatpush2.msra.mxu0 0.0
  %946 = vmatprep.subr.mxu0 0.0
  %947 = vmatpush2.msra.mxu0 0.0
  %948 = vmatprep.subr.mxu0 0.0
  %949 = vmatpush2.msra.mxu0 0.0
  %950 = vmatprep.subr.mxu0 0.0
  %951 = vmatpush2.msra.mxu0 0.0
  %952 = vmatprep.subr.mxu0 0.0
  %953 = vmatpush2.msra.mxu0 0.0
  %954 = vmatprep.subr.mxu0 0.0
  %955 = vmatpush2.msra.mxu0 0.0
  %956 = vmatprep.subr.mxu0 0.0
  %957 = vmatpush2.msra.mxu0 0.0
  %958 = vmatprep.subr.mxu0 0.0
  %959 = vmatpush2.msra.mxu0 0.0
  %960 = vmatprep.subr.mxu0 0.0
  %961 = vmatpush2.msra.mxu0 0.0
  %962 = vmatprep.subr.mxu0 0.0
  %963 = vmatpush2.msra.mxu0 0.0
  %964 = vmatprep.subr.mxu0 0.0
  %965 = vmatpush2.msra.mxu0 0.0
  %966 = vmatprep.subr.mxu0 0.0
  %967 = vmatpush2.msra.mxu0 0.0
  %968 = vmatprep.subr.mxu0 0.0
  %969 = vmatpush2.msra.mxu0 0.0
  %970 = vmatprep.subr.mxu0 0.0
  %971 = vmatpush2.msra.mxu0 0.0
  %972 = vmatprep.subr.mxu0 0.0
  %973 = vmatpush2.msra.mxu0 0.0
  %974 = vmatprep.subr.mxu0 0.0
  %975 = vmatpush2.msra.mxu0 0.0
  %976 = vmatprep.mubr.f32.mxu0 0.0
  %977 = vmatmul.mubr.f32.gmra.mxu0 %v897
  %v978 = vpop.f32.mrf.mxu0
  %v979 = vadd.f32 0.0, %v978
  %v980 = vpop.f32.mrf.mxu0
  %v981 = vadd.f32 0.0, %v980
  %982 = vdwg.mxu0
  %983 = vmatprep.subr.mxu0 0.0
  %984 = vmatpush1.msra.mxu0 0.0
  %985 = vmatprep.subr.mxu0 0.0
  %986 = vmatpush1.msra.mxu0 0.0
  %987 = vmatprep.subr.mxu0 0.0
  %988 = vmatpush1.msra.mxu0 0.0
  %989 = vmatprep.subr.mxu0 0.0
  %990 = vmatpush1.msra.mxu0 0.0
  %991 = vmatprep.subr.mxu0 0.0
  %992 = vmatpush1.msra.mxu0 0.0
  %993 = vmatprep.subr.mxu0 0.0
  %994 = vmatpush1.msra.mxu0 0.0
  %995 = vmatprep.subr.mxu0 0.0
  %996 = vmatpush1.msra.mxu0 0.0
  %997 = vmatprep.subr.mxu0 0.0
  %998 = vmatpush1.msra.mxu0 0.0
  %999 = vmatprep.subr.mxu0 0.0
  %1000 = vmatpush1.msra.mxu0 0.0
  %1001 = vmatprep.subr.mxu0 0.0
  %1002 = vmatpush1.msra.mxu0 0.0
  %1003 = vmatprep.subr.mxu0 0.0
  %1004 = vmatpush1.msra.mxu0 0.0
  %1005 = vmatprep.subr.mxu0 0.0
  %1006 = vmatpush1.msra.mxu0 0.0
  %1007 = vmatprep.subr.mxu0 0.0
  %1008 = vmatpush1.msra.mxu0 0.0
  %1009 = vmatprep.subr.mxu0 0.0
  %1010 = vmatpush1.msra.mxu0 0.0
  %1011 = vmatprep.subr.mxu0 0.0
  %1012 = vmatpush1.msra.mxu0 0.0
  %1013 = vmatprep.subr.mxu0 %v910
  %1014 = vmatpush1.msra.mxu0 %v907
  %1015 = vmatprep.subr.mxu0 0.0
  %1016 = vmatpush2.msra.mxu0 0.0
  %1017 = vmatprep.subr.mxu0 0.0
  %1018 = vmatpush2.msra.mxu0 0.0
  %1019 = vmatprep.subr.mxu0 0.0
  %1020 = vmatpush2.msra.mxu0 0.0
  %1021 = vmatprep.subr.mxu0 0.0
  %1022 = vmatpush2.msra.mxu0 0.0
  %1023 = vmatprep.subr.mxu0 0.0
  %1024 = vmatpush2.msra.mxu0 0.0
  %1025 = vmatprep.subr.mxu0 0.0
  %1026 = vmatpush2.msra.mxu0 0.0
  %1027 = vmatprep.subr.mxu0 0.0
  %1028 = vmatpush2.msra.mxu0 0.0
  %1029 = vmatprep.subr.mxu0 0.0
  %1030 = vmatpush2.msra.mxu0 0.0
  %1031 = vmatprep.subr.mxu0 0.0
  %1032 = vmatpush2.msra.mxu0 0.0
  %1033 = vmatprep.subr.mxu0 0.0
  %1034 = vmatpush2.msra.mxu0 0.0
  %1035 = vmatprep.subr.mxu0 0.0
  %1036 = vmatpush2.msra.mxu0 0.0
  %1037 = vmatprep.subr.mxu0 0.0
  %1038 = vmatpush2.msra.mxu0 0.0
  %1039 = vmatprep.subr.mxu0 0.0
  %1040 = vmatpush2.msra.mxu0 0.0
  %1041 = vmatprep.subr.mxu0 0.0
  %1042 = vmatpush2.msra.mxu0 0.0
  %1043 = vmatprep.subr.mxu0 0.0
  %1044 = vmatpush2.msra.mxu0 0.0
  %1045 = vmatprep.subr.mxu0 0.0
  %1046 = vmatpush2.msra.mxu0 0.0
  %1047 = vmatprep.mubr.f32.mxu0 0.0
  %1048 = vmatmul.mubr.f32.gmra.mxu0 %v897
  %v1049 = vpop.f32.mrf.mxu0
  %v1050 = vadd.f32 0.0, %v1049
  %v1051 = vpop.f32.mrf.mxu0
  %v1052 = vadd.f32 0.0, %v1051
  %1053 = vdwg.mxu0
  %1054 = vrot.lane.b32.xlu0 %v979, 17
  %v1055 = vpop.permute.xlu0 %1054
  %1056 = vrot.lane.b32.xlu0 %v981, 17
  %v1057 = vpop.permute.xlu0 %1056
  %1058 = vrot.lane.b32.xlu0 %v1050, 17
  %v1059 = vpop.permute.xlu0 %1058
  %1060 = vrot.lane.b32.xlu0 %v1052, 17
  %v1061 = vpop.permute.xlu0 %1060
  %v1062 = vlaneseq
  %v1063 = vand.u32 %v1062, 127
  %vm1064 = vcmp.lt.s32.totalorder %v1063, 17
  %v1065 = vsel %vm1064, %v1059, %v1061
  %v1066 = vsel %vm1064, %v1057, %v1059
  %v1067 = vsel %vm1064, %v1055, %v1057
  %v1068 = vsel %vm1064, %v1061, %v1055
  %v1069 = vmul.f32 %v1068, %v74
  %v1070 = vmul.f32 %v1067, %v78
  %v1071 = vmul.f32 %v1066, %v82
  %v1072 = vmul.f32 %v1065, %v86
  %v1073 = vmul.f32 %v1069, %v35
  %v1074 = vmul.f32 %v1070, %v35
  %v1075 = vmul.f32 %v1071, %v35
  %v1076 = vmul.f32 %v1072, %v35
  %v1077 = vadd.f32 %v31, %v1073
  %v1078 = vadd.f32 %v31, %v1074
  %v1079 = vadd.f32 %v31, %v1075
  %v1080 = vadd.f32 %v31, %v1076
  %1081 = vrot.lane.b32.xlu0 %v979, 16
  %v1082 = vpop.permute.xlu0 %1081
  %1083 = vrot.lane.b32.xlu0 %v981, 16
  %v1084 = vpop.permute.xlu0 %1083
  %1085 = vrot.lane.b32.xlu0 %v1050, 16
  %v1086 = vpop.permute.xlu0 %1085
  %1087 = vrot.lane.b32.xlu0 %v1052, 16
  %v1088 = vpop.permute.xlu0 %1087
  %vm1089 = vcmp.lt.s32.totalorder %v1063, 16
  %v1090 = vsel %vm1089, %v1086, %v1088
  %v1091 = vsel %vm1089, %v1084, %v1086
  %v1092 = vsel %vm1089, %v1082, %v1084
  %v1093 = vsel %vm1089, %v1088, %v1082
  %v1094 = vmul.f32 %v1093, %v97
  %v1095 = vmul.f32 %v1092, %v101
  %v1096 = vmul.f32 %v1091, %v105
  %v1097 = vmul.f32 %v1090, %v109
  %v1098 = vmul.f32 %v1094, %v39
  %v1099 = vmul.f32 %v1095, %v39
  %v1100 = vmul.f32 %v1096, %v39
  %v1101 = vmul.f32 %v1097, %v39
  %v1102 = vadd.f32 %v1077, %v1098
  %v1103 = vadd.f32 %v1078, %v1099
  %v1104 = vadd.f32 %v1079, %v1100
  %v1105 = vadd.f32 %v1080, %v1101
  %1106 = vrot.lane.b32.xlu0 %v979, 15
  %v1107 = vpop.permute.xlu0 %1106
  %1108 = vrot.lane.b32.xlu0 %v981, 15
  %v1109 = vpop.permute.xlu0 %1108
  %1110 = vrot.lane.b32.xlu0 %v1050, 15
  %v1111 = vpop.permute.xlu0 %1110
  %1112 = vrot.lane.b32.xlu0 %v1052, 15
  %v1113 = vpop.permute.xlu0 %1112
  %vm1114 = vcmp.lt.s32.totalorder %v1063, 15
  %v1115 = vsel %vm1114, %v1111, %v1113
  %v1116 = vsel %vm1114, %v1109, %v1111
  %v1117 = vsel %vm1114, %v1107, %v1109
  %v1118 = vsel %vm1114, %v1113, %v1107
  %v1119 = vmul.f32 %v1118, %v120
  %v1120 = vmul.f32 %v1117, %v124
  %v1121 = vmul.f32 %v1116, %v128
  %v1122 = vmul.f32 %v1115, %v132
  %v1123 = vmul.f32 %v1119, %v43
  %v1124 = vmul.f32 %v1120, %v43
  %v1125 = vmul.f32 %v1121, %v43
  %v1126 = vmul.f32 %v1122, %v43
  %v1127 = vadd.f32 %v1102, %v1123
  %v1128 = vadd.f32 %v1103, %v1124
  %v1129 = vadd.f32 %v1104, %v1125
  %v1130 = vadd.f32 %v1105, %v1126
  %1131 = vrot.lane.b32.xlu0 %v979, 1
  %v1132 = vpop.permute.xlu0 %1131
  %1133 = vrot.lane.b32.xlu0 %v981, 1
  %v1134 = vpop.permute.xlu0 %1133
  %1135 = vrot.lane.b32.xlu0 %v1050, 1
  %v1136 = vpop.permute.xlu0 %1135
  %1137 = vrot.lane.b32.xlu0 %v1052, 1
  %v1138 = vpop.permute.xlu0 %1137
  %vm1139 = vcmp.lt.s32.totalorder %v1063, 1
  %v1140 = vsel %vm1139, %v1136, %v1138
  %v1141 = vsel %vm1139, %v1134, %v1136
  %v1142 = vsel %vm1139, %v1132, %v1134
  %v1143 = vsel %vm1139, %v1138, %v1132
  %v1144 = vmul.f32 %v1143, %v143
  %v1145 = vmul.f32 %v1142, %v147
  %v1146 = vmul.f32 %v1141, %v151
  %v1147 = vmul.f32 %v1140, %v155
  %v1148 = vmul.f32 %v1144, %v47
  %v1149 = vmul.f32 %v1145, %v47
  %v1150 = vmul.f32 %v1146, %v47
  %v1151 = vmul.f32 %v1147, %v47
  %v1152 = vadd.f32 %v1127, %v1148
  %v1153 = vadd.f32 %v1128, %v1149
  %v1154 = vadd.f32 %v1129, %v1150
  %v1155 = vadd.f32 %v1130, %v1151
  %v1156 = vmul.f32 %v979, %v51
  %v1157 = vmul.f32 %v981, %v51
  %v1158 = vmul.f32 %v1050, %v51
  %v1159 = vmul.f32 %v1052, %v51
  %v1160 = vadd.f32 %v1152, %v1156
  %v1161 = vadd.f32 %v1153, %v1157
  %v1162 = vadd.f32 %v1154, %v1158
  %v1163 = vadd.f32 %v1155, %v1159
  %1164 = vrot.lane.b32.xlu0 %v979, 127
  %v1165 = vpop.permute.xlu0 %1164
  %1166 = vrot.lane.b32.xlu0 %v981, 127
  %v1167 = vpop.permute.xlu0 %1166
  %1168 = vrot.lane.b32.xlu0 %v1050, 127
  %v1169 = vpop.permute.xlu0 %1168
  %1170 = vrot.lane.b32.xlu0 %v1052, 127
  %v1171 = vpop.permute.xlu0 %1170
  %vm1172 = vcmp.lt.s32.totalorder %v1063, 127
  %v1173 = vsel %vm1172, %v1169, %v1171
  %v1174 = vsel %vm1172, %v1167, %v1169
  %v1175 = vsel %vm1172, %v1165, %v1167
  %v1176 = vsel %vm1172, %v1171, %v1165
  %v1177 = vmul.f32 %v1175, %v166
  %v1178 = vmul.f32 %v1174, %v170
  %v1179 = vmul.f32 %v1173, %v174
  %v1180 = vmul.f32 %v1176, %v178
  %v1181 = vmul.f32 %v1177, %v55
  %v1182 = vmul.f32 %v1178, %v55
  %v1183 = vmul.f32 %v1179, %v55
  %v1184 = vmul.f32 %v1180, %v55
  %v1185 = vadd.f32 %v1160, %v1181
  %v1186 = vadd.f32 %v1161, %v1182
  %v1187 = vadd.f32 %v1162, %v1183
  %v1188 = vadd.f32 %v1163, %v1184
  %1189 = vrot.lane.b32.xlu0 %v979, 113
  %v1190 = vpop.permute.xlu0 %1189
  %1191 = vrot.lane.b32.xlu0 %v981, 113
  %v1192 = vpop.permute.xlu0 %1191
  %1193 = vrot.lane.b32.xlu0 %v1050, 113
  %v1194 = vpop.permute.xlu0 %1193
  %1195 = vrot.lane.b32.xlu0 %v1052, 113
  %v1196 = vpop.permute.xlu0 %1195
  %vm1197 = vcmp.lt.s32.totalorder %v1063, 113
  %v1198 = vsel %vm1197, %v1194, %v1196
  %v1199 = vsel %vm1197, %v1192, %v1194
  %v1200 = vsel %vm1197, %v1190, %v1192
  %v1201 = vsel %vm1197, %v1196, %v1190
  %v1202 = vmul.f32 %v1200, %v189
  %v1203 = vmul.f32 %v1199, %v193
  %v1204 = vmul.f32 %v1198, %v197
  %v1205 = vmul.f32 %v1201, %v201
  %v1206 = vmul.f32 %v1202, %v59
  %v1207 = vmul.f32 %v1203, %v59
  %v1208 = vmul.f32 %v1204, %v59
  %v1209 = vmul.f32 %v1205, %v59
  %v1210 = vadd.f32 %v1185, %v1206
  %v1211 = vadd.f32 %v1186, %v1207
  %v1212 = vadd.f32 %v1187, %v1208
  %v1213 = vadd.f32 %v1188, %v1209
  %1214 = vrot.lane.b32.xlu0 %v979, 112
  %v1215 = vpop.permute.xlu0 %1214
  %1216 = vrot.lane.b32.xlu0 %v981, 112
  %v1217 = vpop.permute.xlu0 %1216
  %1218 = vrot.lane.b32.xlu0 %v1050, 112
  %v1219 = vpop.permute.xlu0 %1218
  %1220 = vrot.lane.b32.xlu0 %v1052, 112
  %v1221 = vpop.permute.xlu0 %1220
  %vm1222 = vcmp.lt.s32.totalorder %v1063, 112
  %v1223 = vsel %vm1222, %v1219, %v1221
  %v1224 = vsel %vm1222, %v1217, %v1219
  %v1225 = vsel %vm1222, %v1215, %v1217
  %v1226 = vsel %vm1222, %v1221, %v1215
  %v1227 = vmul.f32 %v1225, %v212
  %v1228 = vmul.f32 %v1224, %v216
  %v1229 = vmul.f32 %v1223, %v220
  %v1230 = vmul.f32 %v1226, %v224
  %v1231 = vmul.f32 %v1227, %v63
  %v1232 = vmul.f32 %v1228, %v63
  %v1233 = vmul.f32 %v1229, %v63
  %v1234 = vmul.f32 %v1230, %v63
  %v1235 = vadd.f32 %v1210, %v1231
  %v1236 = vadd.f32 %v1211, %v1232
  %v1237 = vadd.f32 %v1212, %v1233
  %v1238 = vadd.f32 %v1213, %v1234
  %1239 = vrot.lane.b32.xlu0 %v979, 111
  %v1240 = vpop.permute.xlu0 %1239
  %1241 = vrot.lane.b32.xlu0 %v981, 111
  %v1242 = vpop.permute.xlu0 %1241
  %1243 = vrot.lane.b32.xlu0 %v1050, 111
  %v1244 = vpop.permute.xlu0 %1243
  %1245 = vrot.lane.b32.xlu0 %v1052, 111
  %v1246 = vpop.permute.xlu0 %1245
  %vm1247 = vcmp.lt.s32.totalorder %v1063, 111
  %v1248 = vsel %vm1247, %v1244, %v1246
  %v1249 = vsel %vm1247, %v1242, %v1244
  %v1250 = vsel %vm1247, %v1240, %v1242
  %v1251 = vsel %vm1247, %v1246, %v1240
  %v1252 = vmul.f32 %v1250, %v235
  %v1253 = vmul.f32 %v1249, %v239
  %v1254 = vmul.f32 %v1248, %v243
  %v1255 = vmul.f32 %v1251, %v247
  %v1256 = vmul.f32 %v1252, %v67
  %v1257 = vmul.f32 %v1253, %v67
  %v1258 = vmul.f32 %v1254, %v67
  %v1259 = vmul.f32 %v1255, %v67
  %v1260 = vadd.f32 %v1235, %v1256
  %v1261 = vadd.f32 %v1236, %v1257
  %v1262 = vadd.f32 %v1237, %v1258
  %v1263 = vadd.f32 %v1238, %v1259
  %v1264 = vadd.f32 %v1260, %v31
  %v1265 = vadd.f32 %v1261, %v31
  %v1266 = vadd.f32 %v1262, %v31
  %v1267 = vadd.f32 %v1263, %v31
  %1268 = vrot.lane.b32.xlu0 %v815, 17
  %v1269 = vpop.permute.xlu0 %1268
  %1270 = vrot.lane.b32.xlu0 %v817, 17
  %v1271 = vpop.permute.xlu0 %1270
  %1272 = vrot.lane.b32.xlu0 %v886, 17
  %v1273 = vpop.permute.xlu0 %1272
  %1274 = vrot.lane.b32.xlu0 %v888, 17
  %v1275 = vpop.permute.xlu0 %1274
  %v1276 = vsel %vm1064, %v1273, %v1275
  %v1277 = vsel %vm1064, %v1271, %v1273
  %v1278 = vsel %vm1064, %v1269, %v1271
  %v1279 = vsel %vm1064, %v1275, %v1269
  %v1280 = vmul.f32 %v1279, %v74
  %v1281 = vmul.f32 %v1278, %v78
  %v1282 = vmul.f32 %v1277, %v82
  %v1283 = vmul.f32 %v1276, %v86
  %v1284 = vmul.f32 %v1280, %v35
  %v1285 = vmul.f32 %v1281, %v35
  %v1286 = vmul.f32 %v1282, %v35
  %v1287 = vmul.f32 %v1283, %v35
  %v1288 = vadd.f32 %v1264, %v1284
  %v1289 = vadd.f32 %v1265, %v1285
  %v1290 = vadd.f32 %v1266, %v1286
  %v1291 = vadd.f32 %v1267, %v1287
  %1292 = vrot.lane.b32.xlu0 %v673, 16
  %v1293 = vpop.permute.xlu0 %1292
  %1294 = vrot.lane.b32.xlu0 %v675, 16
  %v1295 = vpop.permute.xlu0 %1294
  %1296 = vrot.lane.b32.xlu0 %v744, 16
  %v1297 = vpop.permute.xlu0 %1296
  %1298 = vrot.lane.b32.xlu0 %v746, 16
  %v1299 = vpop.permute.xlu0 %1298
  %v1300 = vsel %vm1089, %v1297, %v1299
  %v1301 = vsel %vm1089, %v1295, %v1297
  %v1302 = vsel %vm1089, %v1293, %v1295
  %v1303 = vsel %vm1089, %v1299, %v1293
  %v1304 = vmul.f32 %v1303, %v97
  %v1305 = vmul.f32 %v1302, %v101
  %v1306 = vmul.f32 %v1301, %v105
  %v1307 = vmul.f32 %v1300, %v109
  %v1308 = vmul.f32 %v1304, %v39
  %v1309 = vmul.f32 %v1305, %v39
  %v1310 = vmul.f32 %v1306, %v39
  %v1311 = vmul.f32 %v1307, %v39
  %v1312 = vadd.f32 %v1288, %v1308
  %v1313 = vadd.f32 %v1289, %v1309
  %v1314 = vadd.f32 %v1290, %v1310
  %v1315 = vadd.f32 %v1291, %v1311
  %v1316 = vmul.f32 %v1304, %v35
  %v1317 = vmul.f32 %v1305, %v35
  %v1318 = vmul.f32 %v1306, %v35
  %v1319 = vmul.f32 %v1307, %v35
  %v1320 = vadd.f32 %v1264, %v1316
  %v1321 = vadd.f32 %v1265, %v1317
  %v1322 = vadd.f32 %v1266, %v1318
  %v1323 = vadd.f32 %v1267, %v1319
  %1324 = vrot.lane.b32.xlu0 %v815, 16
  %v1325 = vpop.permute.xlu0 %1324
  %1326 = vrot.lane.b32.xlu0 %v817, 16
  %v1327 = vpop.permute.xlu0 %1326
  %1328 = vrot.lane.b32.xlu0 %v886, 16
  %v1329 = vpop.permute.xlu0 %1328
  %1330 = vrot.lane.b32.xlu0 %v888, 16
  %v1331 = vpop.permute.xlu0 %1330
  %v1332 = vsel %vm1089, %v1329, %v1331
  %v1333 = vsel %vm1089, %v1327, %v1329
  %v1334 = vsel %vm1089, %v1325, %v1327
  %v1335 = vsel %vm1089, %v1331, %v1325
  %v1336 = vmul.f32 %v1335, %v97
  %v1337 = vmul.f32 %v1334, %v101
  %v1338 = vmul.f32 %v1333, %v105
  %v1339 = vmul.f32 %v1332, %v109
  %v1340 = vmul.f32 %v1336, %v43
  %v1341 = vmul.f32 %v1337, %v43
  %v1342 = vmul.f32 %v1338, %v43
  %v1343 = vmul.f32 %v1339, %v43
  %v1344 = vadd.f32 %v1312, %v1340
  %v1345 = vadd.f32 %v1313, %v1341
  %v1346 = vadd.f32 %v1314, %v1342
  %v1347 = vadd.f32 %v1315, %v1343
  %v1348 = vmul.f32 %v1336, %v39
  %v1349 = vmul.f32 %v1337, %v39
  %v1350 = vmul.f32 %v1338, %v39
  %v1351 = vmul.f32 %v1339, %v39
  %v1352 = vadd.f32 %v1320, %v1348
  %v1353 = vadd.f32 %v1321, %v1349
  %v1354 = vadd.f32 %v1322, %v1350
  %v1355 = vadd.f32 %v1323, %v1351
  %1356 = vrot.lane.b32.xlu0 %v673, 15
  %v1357 = vpop.permute.xlu0 %1356
  %1358 = vrot.lane.b32.xlu0 %v675, 15
  %v1359 = vpop.permute.xlu0 %1358
  %1360 = vrot.lane.b32.xlu0 %v744, 15
  %v1361 = vpop.permute.xlu0 %1360
  %1362 = vrot.lane.b32.xlu0 %v746, 15
  %v1363 = vpop.permute.xlu0 %1362
  %v1364 = vsel %vm1114, %v1361, %v1363
  %v1365 = vsel %vm1114, %v1359, %v1361
  %v1366 = vsel %vm1114, %v1357, %v1359
  %v1367 = vsel %vm1114, %v1363, %v1357
  %v1368 = vmul.f32 %v1367, %v120
  %v1369 = vmul.f32 %v1366, %v124
  %v1370 = vmul.f32 %v1365, %v128
  %v1371 = vmul.f32 %v1364, %v132
  %v1372 = vmul.f32 %v1368, %v43
  %v1373 = vmul.f32 %v1369, %v43
  %v1374 = vmul.f32 %v1370, %v43
  %v1375 = vmul.f32 %v1371, %v43
  %v1376 = vadd.f32 %v1352, %v1372
  %v1377 = vadd.f32 %v1353, %v1373
  %v1378 = vadd.f32 %v1354, %v1374
  %v1379 = vadd.f32 %v1355, %v1375
  %1380 = vrot.lane.b32.xlu0 %v531, 1
  %v1381 = vpop.permute.xlu0 %1380
  %1382 = vrot.lane.b32.xlu0 %v533, 1
  %v1383 = vpop.permute.xlu0 %1382
  %1384 = vrot.lane.b32.xlu0 %v602, 1
  %v1385 = vpop.permute.xlu0 %1384
  %1386 = vrot.lane.b32.xlu0 %v604, 1
  %v1387 = vpop.permute.xlu0 %1386
  %v1388 = vsel %vm1139, %v1385, %v1387
  %v1389 = vsel %vm1139, %v1383, %v1385
  %v1390 = vsel %vm1139, %v1381, %v1383
  %v1391 = vsel %vm1139, %v1387, %v1381
  %v1392 = vmul.f32 %v1391, %v143
  %v1393 = vmul.f32 %v1390, %v147
  %v1394 = vmul.f32 %v1389, %v151
  %v1395 = vmul.f32 %v1388, %v155
  %v1396 = vmul.f32 %v1392, %v47
  %v1397 = vmul.f32 %v1393, %v47
  %v1398 = vmul.f32 %v1394, %v47
  %v1399 = vmul.f32 %v1395, %v47
  %v1400 = vadd.f32 %v1344, %v1396
  %v1401 = vadd.f32 %v1345, %v1397
  %v1402 = vadd.f32 %v1346, %v1398
  %v1403 = vadd.f32 %v1347, %v1399
  %v1404 = vmul.f32 %v1392, %v35
  %v1405 = vmul.f32 %v1393, %v35
  %v1406 = vmul.f32 %v1394, %v35
  %v1407 = vmul.f32 %v1395, %v35
  %v1408 = vadd.f32 %v1264, %v1404
  %v1409 = vadd.f32 %v1265, %v1405
  %v1410 = vadd.f32 %v1266, %v1406
  %v1411 = vadd.f32 %v1267, %v1407
  %v1412 = vmul.f32 %v389, %v51
  %v1413 = vmul.f32 %v391, %v51
  %v1414 = vmul.f32 %v460, %v51
  %v1415 = vmul.f32 %v462, %v51
  %v1416 = vadd.f32 %v1400, %v1412
  %v1417 = vadd.f32 %v1401, %v1413
  %v1418 = vadd.f32 %v1402, %v1414
  %v1419 = vadd.f32 %v1403, %v1415
  %v1420 = vmul.f32 %v389, %v47
  %v1421 = vmul.f32 %v391, %v47
  %v1422 = vmul.f32 %v460, %v47
  %v1423 = vmul.f32 %v462, %v47
  %v1424 = vadd.f32 %v1376, %v1420
  %v1425 = vadd.f32 %v1377, %v1421
  %v1426 = vadd.f32 %v1378, %v1422
  %v1427 = vadd.f32 %v1379, %v1423
  %v1428 = vmul.f32 %v389, %v39
  %v1429 = vmul.f32 %v391, %v39
  %v1430 = vmul.f32 %v460, %v39
  %v1431 = vmul.f32 %v462, %v39
  %v1432 = vadd.f32 %v1408, %v1428
  %v1433 = vadd.f32 %v1409, %v1429
  %v1434 = vadd.f32 %v1410, %v1430
  %v1435 = vadd.f32 %v1411, %v1431
  %v1436 = vmul.f32 %v389, %v35
  %v1437 = vmul.f32 %v391, %v35
  %v1438 = vmul.f32 %v460, %v35
  %v1439 = vmul.f32 %v462, %v35
  %v1440 = vadd.f32 %v1264, %v1436
  %v1441 = vadd.f32 %v1265, %v1437
  %v1442 = vadd.f32 %v1266, %v1438
  %v1443 = vadd.f32 %v1267, %v1439
  %v1444 = vmul.f32 %v531, %v55
  %v1445 = vmul.f32 %v533, %v55
  %v1446 = vmul.f32 %v602, %v55
  %v1447 = vmul.f32 %v604, %v55
  %v1448 = vadd.f32 %v1416, %v1444
  %v1449 = vadd.f32 %v1417, %v1445
  %v1450 = vadd.f32 %v1418, %v1446
  %v1451 = vadd.f32 %v1419, %v1447
  %v1452 = vmul.f32 %v531, %v51
  %v1453 = vmul.f32 %v533, %v51
  %v1454 = vmul.f32 %v602, %v51
  %v1455 = vmul.f32 %v604, %v51
  %v1456 = vadd.f32 %v1424, %v1452
  %v1457 = vadd.f32 %v1425, %v1453
  %v1458 = vadd.f32 %v1426, %v1454
  %v1459 = vadd.f32 %v1427, %v1455
  %v1460 = vmul.f32 %v531, %v43
  %v1461 = vmul.f32 %v533, %v43
  %v1462 = vmul.f32 %v602, %v43
  %v1463 = vmul.f32 %v604, %v43
  %v1464 = vadd.f32 %v1432, %v1460
  %v1465 = vadd.f32 %v1433, %v1461
  %v1466 = vadd.f32 %v1434, %v1462
  %v1467 = vadd.f32 %v1435, %v1463
  %v1468 = vmul.f32 %v531, %v39
  %v1469 = vmul.f32 %v533, %v39
  %v1470 = vmul.f32 %v602, %v39
  %v1471 = vmul.f32 %v604, %v39
  %v1472 = vadd.f32 %v1440, %v1468
  %v1473 = vadd.f32 %v1441, %v1469
  %v1474 = vadd.f32 %v1442, %v1470
  %v1475 = vadd.f32 %v1443, %v1471
  %1476 = vrot.lane.b32.xlu0 %v389, 127
  %v1477 = vpop.permute.xlu0 %1476
  %1478 = vrot.lane.b32.xlu0 %v391, 127
  %v1479 = vpop.permute.xlu0 %1478
  %1480 = vrot.lane.b32.xlu0 %v460, 127
  %v1481 = vpop.permute.xlu0 %1480
  %1482 = vrot.lane.b32.xlu0 %v462, 127
  %v1483 = vpop.permute.xlu0 %1482
  %v1484 = vsel %vm1172, %v1481, %v1483
  %v1485 = vsel %vm1172, %v1479, %v1481
  %v1486 = vsel %vm1172, %v1477, %v1479
  %v1487 = vsel %vm1172, %v1483, %v1477
  %v1488 = vmul.f32 %v1486, %v166
  %v1489 = vmul.f32 %v1485, %v170
  %v1490 = vmul.f32 %v1484, %v174
  %v1491 = vmul.f32 %v1487, %v178
  %v1492 = vmul.f32 %v1488, %v55
  %v1493 = vmul.f32 %v1489, %v55
  %v1494 = vmul.f32 %v1490, %v55
  %v1495 = vmul.f32 %v1491, %v55
  %v1496 = vadd.f32 %v1456, %v1492
  %v1497 = vadd.f32 %v1457, %v1493
  %v1498 = vadd.f32 %v1458, %v1494
  %v1499 = vadd.f32 %v1459, %v1495
  %v1500 = vmul.f32 %v1488, %v43
  %v1501 = vmul.f32 %v1489, %v43
  %v1502 = vmul.f32 %v1490, %v43
  %v1503 = vmul.f32 %v1491, %v43
  %v1504 = vadd.f32 %v1472, %v1500
  %v1505 = vadd.f32 %v1473, %v1501
  %v1506 = vadd.f32 %v1474, %v1502
  %v1507 = vadd.f32 %v1475, %v1503
  %1508 = vrot.lane.b32.xlu0 %v815, 1
  %v1509 = vpop.permute.xlu0 %1508
  %1510 = vrot.lane.b32.xlu0 %v817, 1
  %v1511 = vpop.permute.xlu0 %1510
  %1512 = vrot.lane.b32.xlu0 %v886, 1
  %v1513 = vpop.permute.xlu0 %1512
  %1514 = vrot.lane.b32.xlu0 %v888, 1
  %v1515 = vpop.permute.xlu0 %1514
  %v1516 = vsel %vm1139, %v1513, %v1515
  %v1517 = vsel %vm1139, %v1511, %v1513
  %v1518 = vsel %vm1139, %v1509, %v1511
  %v1519 = vsel %vm1139, %v1515, %v1509
  %v1520 = vmul.f32 %v1519, %v143
  %v1521 = vmul.f32 %v1518, %v147
  %v1522 = vmul.f32 %v1517, %v151
  %v1523 = vmul.f32 %v1516, %v155
  %v1524 = vmul.f32 %v1520, %v59
  %v1525 = vmul.f32 %v1521, %v59
  %v1526 = vmul.f32 %v1522, %v59
  %v1527 = vmul.f32 %v1523, %v59
  %v1528 = vadd.f32 %v1448, %v1524
  %v1529 = vadd.f32 %v1449, %v1525
  %v1530 = vadd.f32 %v1450, %v1526
  %v1531 = vadd.f32 %v1451, %v1527
  %v1532 = vmul.f32 %v1520, %v47
  %v1533 = vmul.f32 %v1521, %v47
  %v1534 = vmul.f32 %v1522, %v47
  %v1535 = vmul.f32 %v1523, %v47
  %v1536 = vadd.f32 %v1464, %v1532
  %v1537 = vadd.f32 %v1465, %v1533
  %v1538 = vadd.f32 %v1466, %v1534
  %v1539 = vadd.f32 %v1467, %v1535
  %v1540 = vmul.f32 %v673, %v63
  %v1541 = vmul.f32 %v675, %v63
  %v1542 = vmul.f32 %v744, %v63
  %v1543 = vmul.f32 %v746, %v63
  %v1544 = vadd.f32 %v1528, %v1540
  %v1545 = vadd.f32 %v1529, %v1541
  %v1546 = vadd.f32 %v1530, %v1542
  %v1547 = vadd.f32 %v1531, %v1543
  %v1548 = vmul.f32 %v673, %v59
  %v1549 = vmul.f32 %v675, %v59
  %v1550 = vmul.f32 %v744, %v59
  %v1551 = vmul.f32 %v746, %v59
  %v1552 = vadd.f32 %v1496, %v1548
  %v1553 = vadd.f32 %v1497, %v1549
  %v1554 = vadd.f32 %v1498, %v1550
  %v1555 = vadd.f32 %v1499, %v1551
  %v1556 = vmul.f32 %v673, %v51
  %v1557 = vmul.f32 %v675, %v51
  %v1558 = vmul.f32 %v744, %v51
  %v1559 = vmul.f32 %v746, %v51
  %v1560 = vadd.f32 %v1536, %v1556
  %v1561 = vadd.f32 %v1537, %v1557
  %v1562 = vadd.f32 %v1538, %v1558
  %v1563 = vadd.f32 %v1539, %v1559
  %v1564 = vmul.f32 %v673, %v47
  %v1565 = vmul.f32 %v675, %v47
  %v1566 = vmul.f32 %v744, %v47
  %v1567 = vmul.f32 %v746, %v47
  %v1568 = vadd.f32 %v1504, %v1564
  %v1569 = vadd.f32 %v1505, %v1565
  %v1570 = vadd.f32 %v1506, %v1566
  %v1571 = vadd.f32 %v1507, %v1567
  %v1572 = vmul.f32 %v815, %v67
  %v1573 = vmul.f32 %v817, %v67
  %v1574 = vmul.f32 %v886, %v67
  %v1575 = vmul.f32 %v888, %v67
  %v1576 = vadd.f32 %v1544, %v1572
  %v1577 = vadd.f32 %v1545, %v1573
  %v1578 = vadd.f32 %v1546, %v1574
  %v1579 = vadd.f32 %v1547, %v1575
  %v1580 = vmul.f32 %v815, %v63
  %v1581 = vmul.f32 %v817, %v63
  %v1582 = vmul.f32 %v886, %v63
  %v1583 = vmul.f32 %v888, %v63
  %v1584 = vadd.f32 %v1552, %v1580
  %v1585 = vadd.f32 %v1553, %v1581
  %v1586 = vadd.f32 %v1554, %v1582
  %v1587 = vadd.f32 %v1555, %v1583
  %v1588 = vmul.f32 %v815, %v55
  %v1589 = vmul.f32 %v817, %v55
  %v1590 = vmul.f32 %v886, %v55
  %v1591 = vmul.f32 %v888, %v55
  %v1592 = vadd.f32 %v1560, %v1588
  %v1593 = vadd.f32 %v1561, %v1589
  %v1594 = vadd.f32 %v1562, %v1590
  %v1595 = vadd.f32 %v1563, %v1591
  %v1596 = vmul.f32 %v815, %v51
  %v1597 = vmul.f32 %v817, %v51
  %v1598 = vmul.f32 %v886, %v51
  %v1599 = vmul.f32 %v888, %v51
  %v1600 = vadd.f32 %v1568, %v1596
  %v1601 = vadd.f32 %v1569, %v1597
  %v1602 = vadd.f32 %v1570, %v1598
  %v1603 = vadd.f32 %v1571, %v1599
  %1604 = vrot.lane.b32.xlu0 %v673, 127
  %v1605 = vpop.permute.xlu0 %1604
  %1606 = vrot.lane.b32.xlu0 %v675, 127
  %v1607 = vpop.permute.xlu0 %1606
  %1608 = vrot.lane.b32.xlu0 %v744, 127
  %v1609 = vpop.permute.xlu0 %1608
  %1610 = vrot.lane.b32.xlu0 %v746, 127
  %v1611 = vpop.permute.xlu0 %1610
  %v1612 = vsel %vm1172, %v1609, %v1611
  %v1613 = vsel %vm1172, %v1607, %v1609
  %v1614 = vsel %vm1172, %v1605, %v1607
  %v1615 = vsel %vm1172, %v1611, %v1605
  %v1616 = vmul.f32 %v1614, %v166
  %v1617 = vmul.f32 %v1613, %v170
  %v1618 = vmul.f32 %v1612, %v174
  %v1619 = vmul.f32 %v1615, %v178
  %v1620 = vmul.f32 %v1616, %v67
  %v1621 = vmul.f32 %v1617, %v67
  %v1622 = vmul.f32 %v1618, %v67
  %v1623 = vmul.f32 %v1619, %v67
  %v1624 = vadd.f32 %v1584, %v1620
  %v1625 = vadd.f32 %v1585, %v1621
  %v1626 = vadd.f32 %v1586, %v1622
  %v1627 = vadd.f32 %v1587, %v1623
  %v1628 = vmul.f32 %v1616, %v55
  %v1629 = vmul.f32 %v1617, %v55
  %v1630 = vmul.f32 %v1618, %v55
  %v1631 = vmul.f32 %v1619, %v55
  %v1632 = vadd.f32 %v1600, %v1628
  %v1633 = vadd.f32 %v1601, %v1629
  %v1634 = vadd.f32 %v1602, %v1630
  %v1635 = vadd.f32 %v1603, %v1631
  %1636 = vrot.lane.b32.xlu0 %v531, 113
  %v1637 = vpop.permute.xlu0 %1636
  %1638 = vrot.lane.b32.xlu0 %v533, 113
  %v1639 = vpop.permute.xlu0 %1638
  %1640 = vrot.lane.b32.xlu0 %v602, 113
  %v1641 = vpop.permute.xlu0 %1640
  %1642 = vrot.lane.b32.xlu0 %v604, 113
  %v1643 = vpop.permute.xlu0 %1642
  %v1644 = vsel %vm1197, %v1641, %v1643
  %v1645 = vsel %vm1197, %v1639, %v1641
  %v1646 = vsel %vm1197, %v1637, %v1639
  %v1647 = vsel %vm1197, %v1643, %v1637
  %v1648 = vmul.f32 %v1646, %v189
  %v1649 = vmul.f32 %v1645, %v193
  %v1650 = vmul.f32 %v1644, %v197
  %v1651 = vmul.f32 %v1647, %v201
  %v1652 = vmul.f32 %v1648, %v59
  %v1653 = vmul.f32 %v1649, %v59
  %v1654 = vmul.f32 %v1650, %v59
  %v1655 = vmul.f32 %v1651, %v59
  %v1656 = vadd.f32 %v1592, %v1652
  %v1657 = vadd.f32 %v1593, %v1653
  %v1658 = vadd.f32 %v1594, %v1654
  %v1659 = vadd.f32 %v1595, %v1655
  %1660 = vrot.lane.b32.xlu0 %v389, 112
  %v1661 = vpop.permute.xlu0 %1660
  %1662 = vrot.lane.b32.xlu0 %v391, 112
  %v1663 = vpop.permute.xlu0 %1662
  %1664 = vrot.lane.b32.xlu0 %v460, 112
  %v1665 = vpop.permute.xlu0 %1664
  %1666 = vrot.lane.b32.xlu0 %v462, 112
  %v1667 = vpop.permute.xlu0 %1666
  %v1668 = vsel %vm1222, %v1665, %v1667
  %v1669 = vsel %vm1222, %v1663, %v1665
  %v1670 = vsel %vm1222, %v1661, %v1663
  %v1671 = vsel %vm1222, %v1667, %v1661
  %v1672 = vmul.f32 %v1670, %v212
  %v1673 = vmul.f32 %v1669, %v216
  %v1674 = vmul.f32 %v1668, %v220
  %v1675 = vmul.f32 %v1671, %v224
  %v1676 = vmul.f32 %v1672, %v63
  %v1677 = vmul.f32 %v1673, %v63
  %v1678 = vmul.f32 %v1674, %v63
  %v1679 = vmul.f32 %v1675, %v63
  %v1680 = vadd.f32 %v1656, %v1676
  %v1681 = vadd.f32 %v1657, %v1677
  %v1682 = vadd.f32 %v1658, %v1678
  %v1683 = vadd.f32 %v1659, %v1679
  %v1684 = vmul.f32 %v1672, %v59
  %v1685 = vmul.f32 %v1673, %v59
  %v1686 = vmul.f32 %v1674, %v59
  %v1687 = vmul.f32 %v1675, %v59
  %v1688 = vadd.f32 %v1632, %v1684
  %v1689 = vadd.f32 %v1633, %v1685
  %v1690 = vadd.f32 %v1634, %v1686
  %v1691 = vadd.f32 %v1635, %v1687
  %1692 = vrot.lane.b32.xlu0 %v531, 112
  %v1693 = vpop.permute.xlu0 %1692
  %1694 = vrot.lane.b32.xlu0 %v533, 112
  %v1695 = vpop.permute.xlu0 %1694
  %1696 = vrot.lane.b32.xlu0 %v602, 112
  %v1697 = vpop.permute.xlu0 %1696
  %1698 = vrot.lane.b32.xlu0 %v604, 112
  %v1699 = vpop.permute.xlu0 %1698
  %v1700 = vsel %vm1222, %v1697, %v1699
  %v1701 = vsel %vm1222, %v1695, %v1697
  %v1702 = vsel %vm1222, %v1693, %v1695
  %v1703 = vsel %vm1222, %v1699, %v1693
  %v1704 = vmul.f32 %v1702, %v212
  %v1705 = vmul.f32 %v1701, %v216
  %v1706 = vmul.f32 %v1700, %v220
  %v1707 = vmul.f32 %v1703, %v224
  %v1708 = vmul.f32 %v1704, %v67
  %v1709 = vmul.f32 %v1705, %v67
  %v1710 = vmul.f32 %v1706, %v67
  %v1711 = vmul.f32 %v1707, %v67
  %v1712 = vadd.f32 %v1680, %v1708
  %v1713 = vadd.f32 %v1681, %v1709
  %v1714 = vadd.f32 %v1682, %v1710
  %v1715 = vadd.f32 %v1683, %v1711
  %v1716 = vmul.f32 %v1704, %v63
  %v1717 = vmul.f32 %v1705, %v63
  %v1718 = vmul.f32 %v1706, %v63
  %v1719 = vmul.f32 %v1707, %v63
  %v1720 = vadd.f32 %v1688, %v1716
  %v1721 = vadd.f32 %v1689, %v1717
  %v1722 = vadd.f32 %v1690, %v1718
  %v1723 = vadd.f32 %v1691, %v1719
  %1724 = vrot.lane.b32.xlu0 %v389, 111
  %v1725 = vpop.permute.xlu0 %1724
  %1726 = vrot.lane.b32.xlu0 %v391, 111
  %v1727 = vpop.permute.xlu0 %1726
  %1728 = vrot.lane.b32.xlu0 %v460, 111
  %v1729 = vpop.permute.xlu0 %1728
  %1730 = vrot.lane.b32.xlu0 %v462, 111
  %v1731 = vpop.permute.xlu0 %1730
  %v1732 = vsel %vm1247, %v1729, %v1731
  %v1733 = vsel %vm1247, %v1727, %v1729
  %v1734 = vsel %vm1247, %v1725, %v1727
  %v1735 = vsel %vm1247, %v1731, %v1725
  %v1736 = vmul.f32 %v1734, %v235
  %v1737 = vmul.f32 %v1733, %v239
  %v1738 = vmul.f32 %v1732, %v243
  %v1739 = vmul.f32 %v1735, %v247
  %v1740 = vmul.f32 %v1736, %v67
  %v1741 = vmul.f32 %v1737, %v67
  %v1742 = vmul.f32 %v1738, %v67
  %v1743 = vmul.f32 %v1739, %v67
  %v1744 = vadd.f32 %v1720, %v1740
  %v1745 = vadd.f32 %v1721, %v1741
  %v1746 = vadd.f32 %v1722, %v1742
  %v1747 = vadd.f32 %v1723, %v1743
  %1748 = vst [vmem:[%s6] sm:$0xff] %v1576
  %1749 = vst [vmem:[%s6 + $0x8] sm:$0xff] %v1577
  %1750 = vst [vmem:[%s6 + $0x10] sm:$0xff] %v1578
  %1751 = vst [vmem:[%s6 + $0x18] sm:$0xff] %v1579
  %s1752 = scalar_lea.vmem %s6, 32
  %1753 = vst [vmem:[%s1752] sm:$0xff] %v1624
  %1754 = vst [vmem:[%s1752 + $0x8] sm:$0xff] %v1625
  %1755 = vst [vmem:[%s1752 + $0x10] sm:$0xff] %v1626
  %1756 = vst [vmem:[%s1752 + $0x18] sm:$0xff] %v1627
  %s1757 = scalar_lea.vmem %s6, 64
  %1758 = vst [vmem:[%s1757] sm:$0xff] %v1712
  %1759 = vst [vmem:[%s1757 + $0x8] sm:$0xff] %v1713
  %1760 = vst [vmem:[%s1757 + $0x10] sm:$0xff] %v1714
  %1761 = vst [vmem:[%s1757 + $0x18] sm:$0xff] %v1715
  %s1762 = scalar_lea.vmem %s6, 96
  %1763 = vst [vmem:[%s1762] sm:$0xff] %v1744
  %1764 = vst [vmem:[%s1762 + $0x8] sm:$0xff] %v1745
  %1765 = vst [vmem:[%s1762 + $0x10] sm:$0xff] %v1746
  %1766 = vst [vmem:[%s1762 + $0x18] sm:$0xff] %v1747
  // Predicated region
  $region26: #{semi_shift_depthwise.1} parent=0 // pred_check
    _
  $region27: #{semi_shift_depthwise.1} parent=0 // pred_check_branch
    %1768 = sbr.rel (0) target = $region29
  $region28: #{semi_shift_depthwise.1} parent=0 // pred_region
    _
  $region29: #{semi_shift_depthwise.1} parent=0 // pred_fallthru
    _
  // Predicated region
  $region30: #{semi_shift_depthwise.1} parent=0 // pred_check
    _
  $region31: #{semi_shift_depthwise.1} parent=0 // pred_check_branch
    %1770 = sbr.rel (0) target = $region33
  $region32: #{semi_shift_depthwise.1} parent=0 // pred_region
    _
  $region33: #{semi_shift_depthwise.1} parent=0 // pred_fallthru
    _

</llo_original>
